<compile_context>
chip_gen: v5e
topology: v5e:2x2
jax: 0.10.0
libtpu: 0.0.40
codegen_flags: <defaults>
</compile_context>

<pallas_src>
import jax
import jax.numpy as jnp
from jax.experimental import pallas as pl
from jax.experimental.pallas import tpu as pltpu

CP = 128            # channel lane padding (lane-dense loads/stores)
_TILE_TARGET = 1024  # target rows per tile (512-1024 per measured HBM-roofline data)


def _pick_tile(m, target=_TILE_TARGET):
    """Largest row tile <= target that divides m and is sublane-aligned (or the full m)."""
    t = min(m, target)
    while t > 1:
        if m % t == 0 and (t % 8 == 0 or t == m):
            return t
        t -= 1
    return m


# ----------------------------------------------------------------------------
# Pallas kernels
# ----------------------------------------------------------------------------
def conv_stats_kernel(p_ref, w_ref, z_ref, s_ref, q_ref):
    """Pass A: im2col matmul (bf16 MXU operands, f32 accumulation) + BN partial statistics."""
    z = jnp.dot(p_ref[...], w_ref[...], preferred_element_type=jnp.float32)   # (tm, CP) f32
    z_ref[...] = z
    s_ref[...] = jnp.sum(z, axis=0, keepdims=True)[None]       # (1, 1, CP) partial sum
    q_ref[...] = jnp.sum(z * z, axis=0, keepdims=True)[None]   # (1, 1, CP) partial sum of squares


def bn_relu_pool_kernel(z4_ref, scale_ref, shift_ref, o_ref):
    """Pass B: folded BN affine (one FMA) + ReLU + 2x2 max-pool over 4 packed lane groups."""
    y = jnp.maximum(z4_ref[...] * scale_ref[...] + shift_ref[...], 0.0)       # (tb, 4*CP) f32
    c = o_ref.shape[-1]
    o_ref[...] = jnp.maximum(jnp.maximum(y[:, 0 * c:1 * c], y[:, 1 * c:2 * c]),
                             jnp.maximum(y[:, 2 * c:3 * c], y[:, 3 * c:4 * c]))


# ----------------------------------------------------------------------------
# Host-side glue
# ----------------------------------------------------------------------------
def _im2col_pool_packed(x_nhwc, k):
    """im2col patches with rows ordered (n, y//2, x//2, y%2, x%2): every 2x2 pooling window
    occupies 4 consecutive rows, enabling the fused in-kernel pool in pass B."""
    n, h, w, c = x_nhwc.shape
    ho, wo = h - k + 1, w - k + 1
    cols = [x_nhwc[:, dy:dy + ho, dx:dx + wo, :] for dy in range(k) for dx in range(k)]
    p = jnp.stack(cols, axis=3).reshape(n, ho, wo, k * k * c)    # columns ordered (dy, dx, ci)
    p = p.reshape(n, ho // 2, 2, wo // 2, 2, k * k * c)
    p = jnp.transpose(p, (0, 1, 3, 2, 4, 5))                     # (n, yh, xh, yi, xi, K)
    return p.reshape(n * ho * wo, k * k * c)


def conv_bn_relu_pool(x_nhwc, w_oihw, gamma, beta):
    """One stage: Conv(k=5, VALID, bias dropped) + BatchNorm(train) + ReLU + 2x2 MaxPool."""
    n, h, w, cin = x_nhwc.shape
    cout, _, kh, kw = w_oihw.shape
    ho, wo = h - kh + 1, w - kw + 1
    m = n * ho * wo
    kdim = kh * kw * cin

    # TODO(synk): patches are still materialized host-side by XLA; an in-kernel shifted-window
    # accumulation would cut the remaining ~K x input re-read at the cost of in-kernel relayouts.
    patches = _im2col_pool_packed(x_nhwc.astype(jnp.bfloat16), kh)            # (m, kdim) bf16
    wmat = jnp.transpose(w_oihw, (2, 3, 1, 0)).reshape(kdim, cout)            # (dy,dx,ci) x co
    wmat = jnp.pad(wmat, ((0, 0), (0, CP - cout))).astype(jnp.bfloat16)       # (kdim, CP) bf16

    par = pltpu.CompilerParams(dimension_semantics=("parallel",))

    # ---- pass A: conv matmul + BN partial stats, tiled over rows ----
    tm = _pick_tile(m)
    gm = m // tm
    z, psum, psq = pl.pallas_call(
        conv_stats_kernel,
        out_shape=(jax.ShapeDtypeStruct((m, CP), jnp.float32),
                   jax.ShapeDtypeStruct((gm, 1, CP), jnp.float32),
                   jax.ShapeDtypeStruct((gm, 1, CP), jnp.float32)),
        grid=(gm,),
        in_specs=[pl.BlockSpec((tm, kdim), lambda i: (i, 0)),
                  pl.BlockSpec((kdim, CP), lambda i: (0, 0))],
        out_specs=(pl.BlockSpec((tm, CP), lambda i: (i, 0)),
                   pl.BlockSpec((1, 1, CP), lambda i: (i, 0, 0)),
                   pl.BlockSpec((1, 1, CP), lambda i: (i, 0, 0))),
        compiler_params=par,
    )(patches, wmat)

    # ---- batch statistics (training-mode BN, biased variance) folded into a single FMA ----
    cnt = jnp.float32(m)
    mean = jnp.sum(psum[:, 0, :], axis=0) / cnt                               # (CP,)
    var = jnp.sum(psq[:, 0, :], axis=0) / cnt - mean * mean                   # biased variance
    scale = jnp.pad(gamma, (0, CP - cout)) * jax.lax.rsqrt(var + 1e-5)
    shift = jnp.pad(beta, (0, CP - cout)) - mean * scale
    scale4 = jnp.tile(scale, 4).reshape(1, 4 * CP)
    shift4 = jnp.tile(shift, 4).reshape(1, 4 * CP)

    # ---- pass B: BN + ReLU + fused 2x2 max-pool (4 packed rows -> 4 lane groups) ----
    mb = m // 4
    z4 = z.reshape(mb, 4 * CP)            # free row-major regroup: 2x2 window -> 4*CP lanes
    tb = _pick_tile(mb)
    out = pl.pallas_call(
        bn_relu_pool_kernel,
        out_shape=jax.ShapeDtypeStruct((mb, CP), jnp.float32),
        grid=(mb // tb,),
        in_specs=[pl.BlockSpec((tb, 4 * CP), lambda i: (i, 0)),
                  pl.BlockSpec((1, 4 * CP), lambda i: (0, 0)),
                  pl.BlockSpec((1, 4 * CP), lambda i: (0, 0))],
        out_specs=pl.BlockSpec((tb, CP), lambda i: (i, 0)),
        compiler_params=par,
    )(z4, scale4, shift4)
    return out.reshape(n, ho // 2, wo // 2, CP)                               # channels padded to CP


def extractor_gray_forward(x_nchw, params):
    w1, b1, g1, be1, w2, b2, g2, be2 = params
    del b1, b2   # conv bias cancels exactly under training-mode BatchNorm (mean subtraction)
    n = x_nchw.shape[0]
    x = jnp.transpose(x_nchw, (0, 2, 3, 1))                                   # NCHW -> NHWC

    y1 = conv_bn_relu_pool(x, w1, g1, be1)                                    # (n, 12, 12, CP)
    y2 = conv_bn_relu_pool(y1[..., :w2.shape[1]], w2, g2, be2)                # (n, 4, 4, CP)
    y2 = y2[..., :w2.shape[0]]                                                # (n, 4, 4, 50)

    # PyTorch flattens the NCHW tensor: (n, 50, 4, 4) -> (n, 800)
    return jnp.transpose(y2, (0, 3, 1, 2)).reshape(n, -1)


# ----------------------------------------------------------------------------
# Pure-JAX reference (mirrors the PyTorch forward, training-mode BN, f32 HIGHEST)
# ----------------------------------------------------------------------------
def reference_forward(x, w1, b1, g1, be1, w2, b2, g2, be2):
    def conv(z, w, b):
        z = jax.lax.conv_general_dilated(
            z, w, (1, 1), 'VALID',
            dimension_numbers=('NCHW', 'OIHW', 'NCHW'),
            precision=jax.lax.Precision.HIGHEST)
        return z + b[None, :, None, None]

    def bn_relu(z, g, b):
        mean = jnp.mean(z, axis=(0, 2, 3), keepdims=True)
        var = jnp.mean((z - mean) ** 2, axis=(0, 2, 3), keepdims=True)
        z = (z - mean) * jax.lax.rsqrt(var + 1e-5)
        z = z * g[None, :, None, None] + b[None, :, None, None]
        return jnp.maximum(z, 0.0)

    def pool(z):
        return jax.lax.reduce_window(z, -jnp.inf, jax.lax.max,
                                     (1, 1, 2, 2), (1, 1, 2, 2), 'VALID')

    z = pool(bn_relu(conv(x, w1, b1), g1, be1))
    z = pool(bn_relu(conv(z, w2, b2), g2, be2))
    return z.reshape(z.shape[0], -1)


# ----------------------------------------------------------------------------
if __name__ == "__main__":
    key = jax.random.PRNGKey(0)
    ks = jax.random.split(key, 9)

    # Deterministic synthetic parameters (shapes from the module's __init__).
    w1 = 0.10 * jax.random.normal(ks[0], (20, 1, 5, 5), jnp.float32)
    b1 = 0.10 * jax.random.normal(ks[1], (20,), jnp.float32)
    g1 = 1.0 + 0.10 * jax.random.normal(ks[2], (20,), jnp.float32)
    be1 = 0.10 * jax.random.normal(ks[3], (20,), jnp.float32)
    w2 = 0.05 * jax.random.normal(ks[4], (50, 20, 5, 5), jnp.float32)
    b2 = 0.10 * jax.random.normal(ks[5], (50,), jnp.float32)
    g2 = 1.0 + 0.10 * jax.random.normal(ks[6], (50,), jnp.float32)
    be2 = 0.10 * jax.random.normal(ks[7], (50,), jnp.float32)
    params = (w1, b1, g1, be1, w2, b2, g2, be2)

    # 28x28 grayscale input => 50*4*4 = 800 features, matching self.in_features.
    x = jax.random.normal(ks[8], (2, 1, 28, 28), jnp.float32)

    out = jax.block_until_ready(jax.jit(extractor_gray_forward)(x, params))
    ref = jax.block_until_ready(reference_forward(x, *params))

    assert out.shape == (2, 800), out.shape
    err = float(jnp.max(jnp.abs(out - ref)))
    # bf16 MXU operands (f32 accumulation/epilogue) compared to an f32 HIGHEST-precision reference.
    assert jnp.allclose(out, ref, atol=3e-2, rtol=3e-2), err

    print("KERNEL_OK")
</pallas_src>

<mosaic_0001>
module attributes {stable_mosaic.version = 11 : i64} {
  func.func @conv_stats_kernel(%arg0: i32, %arg1: memref<576x25xbf16, #tpu.memory_space<vmem>>, %arg2: memref<25x128xbf16, #tpu.memory_space<vmem>>, %arg3: memref<576x128xf32, #tpu.memory_space<vmem>>, %arg4: memref<1x1x128xf32, #tpu.memory_space<vmem>>, %arg5: memref<1x1x128xf32, #tpu.memory_space<vmem>>) attributes {dimension_semantics = [#tpu.dimension_semantics<parallel>], iteration_bounds = array<i64: 2>, scalar_prefetch = 0 : i64, scratch_operands = 0 : i64, tpu.core_type = #tpu.core_type<tc>, window_params = [{transform_indices = @transform_0, window_bounds = array<i64: 576, 25>}, {pipeline_mode = #tpu.pipeline_mode<synchronous>, transform_indices = @transform_1, window_bounds = array<i64: 25, 128>}, {transform_indices = @transform_2, window_bounds = array<i64: 576, 128>}, {transform_indices = @transform_3, window_bounds = array<i64: 1, 1, 128>}, {transform_indices = @transform_4, window_bounds = array<i64: 1, 1, 128>}]} {
    %c0 = arith.constant 0 : index
    %c0_0 = arith.constant 0 : index
    %0 = vector.load %arg1[%c0, %c0_0] : memref<576x25xbf16, #tpu.memory_space<vmem>>, vector<576x25xbf16>
    %c0_1 = arith.constant 0 : index
    %c0_2 = arith.constant 0 : index
    %1 = vector.load %arg2[%c0_1, %c0_2] : memref<25x128xbf16, #tpu.memory_space<vmem>>, vector<25x128xbf16>
    %cst = arith.constant dense<0.000000e+00> : vector<576x128xf32>
    %2 = tpu.matmul %0, %1, %cst {dimension_numbers = #tpu.dot_dimension_numbers<[1], [0], [0], [1], [0, 0, 1, 1], [], []>} : vector<576x25xbf16>, vector<25x128xbf16>, vector<576x128xf32> -> vector<576x128xf32>
    %c0_3 = arith.constant 0 : index
    %c0_4 = arith.constant 0 : index
    %3 = vector.load %arg3[%c0_3, %c0_4] : memref<576x128xf32, #tpu.memory_space<vmem>>, vector<576x128xf32>
    tpu.vector_store %arg3[%c0_3, %c0_4], %2 {strides = array<i32>} : memref<576x128xf32, #tpu.memory_space<vmem>>, vector<576x128xf32>,
    %cst_5 = arith.constant dense<0.000000e+00> : vector<128xf32>
    %4 = vector.multi_reduction <add>, %2, %cst_5 [0] : vector<576x128xf32> to vector<128xf32>
    %5 = vector.shape_cast %4 : vector<128xf32> to vector<1x128xf32>
    %6 = vector.shape_cast %5 : vector<1x128xf32> to vector<1x1x128xf32>
    %c0_6 = arith.constant 0 : index
    %c0_7 = arith.constant 0 : index
    %c0_8 = arith.constant 0 : index
    %7 = vector.load %arg4[%c0_6, %c0_7, %c0_8] : memref<1x1x128xf32, #tpu.memory_space<vmem>>, vector<1x1x128xf32>
    tpu.vector_store %arg4[%c0_6, %c0_7, %c0_8], %6 {strides = array<i32>} : memref<1x1x128xf32, #tpu.memory_space<vmem>>, vector<1x1x128xf32>,
    %8 = arith.mulf %2, %2 : vector<576x128xf32>
    %cst_9 = arith.constant dense<0.000000e+00> : vector<128xf32>
    %9 = vector.multi_reduction <add>, %8, %cst_9 [0] : vector<576x128xf32> to vector<128xf32>
    %10 = vector.shape_cast %9 : vector<128xf32> to vector<1x128xf32>
    %11 = vector.shape_cast %10 : vector<1x128xf32> to vector<1x1x128xf32>
    %c0_10 = arith.constant 0 : index
    %c0_11 = arith.constant 0 : index
    %c0_12 = arith.constant 0 : index
    %12 = vector.load %arg5[%c0_10, %c0_11, %c0_12] : memref<1x1x128xf32, #tpu.memory_space<vmem>>, vector<1x1x128xf32>
    tpu.vector_store %arg5[%c0_10, %c0_11, %c0_12], %11 {strides = array<i32>} : memref<1x1x128xf32, #tpu.memory_space<vmem>>, vector<1x1x128xf32>,
    return
  }
  func.func @transform_0(%arg0: i32) -> (i32, i32) {
    %c0_i32 = arith.constant 0 : i32
    %c0_i32_0 = arith.constant 0 : i32
    return %arg0, %c0_i32 : i32, i32
  }
  func.func @transform_1(%arg0: i32) -> (i32, i32) {
    %c0_i32 = arith.constant 0 : i32
    %c0_i32_0 = arith.constant 0 : i32
    %c0_i32_1 = arith.constant 0 : i32
    return %c0_i32, %c0_i32_0 : i32, i32
  }
  func.func @transform_2(%arg0: i32) -> (i32, i32) {
    %c0_i32 = arith.constant 0 : i32
    %c0_i32_0 = arith.constant 0 : i32
    return %arg0, %c0_i32 : i32, i32
  }
  func.func @transform_3(%arg0: i32) -> (i32, i32, i32) {
    %c0_i32 = arith.constant 0 : i32
    %c0_i32_0 = arith.constant 0 : i32
    %c0_i32_1 = arith.constant 0 : i32
    return %arg0, %c0_i32, %c0_i32_0 : i32, i32, i32
  }
  func.func @transform_4(%arg0: i32) -> (i32, i32, i32) {
    %c0_i32 = arith.constant 0 : i32
    %c0_i32_0 = arith.constant 0 : i32
    %c0_i32_1 = arith.constant 0 : i32
    return %arg0, %c0_i32, %c0_i32_0 : i32, i32, i32
  }
}

module attributes {stable_mosaic.version = 11 : i64} {
  func.func @bn_relu_pool_kernel(%arg0: i32, %arg1: memref<288x512xf32, #tpu.memory_space<vmem>>, %arg2: memref<1x512xf32, #tpu.memory_space<vmem>>, %arg3: memref<1x512xf32, #tpu.memory_space<vmem>>, %arg4: memref<288x128xf32, #tpu.memory_space<vmem>>) attributes {dimension_semantics = [#tpu.dimension_semantics<parallel>], iteration_bounds = array<i64: 1>, scalar_prefetch = 0 : i64, scratch_operands = 0 : i64, tpu.core_type = #tpu.core_type<tc>, window_params = [{transform_indices = @transform_0, window_bounds = array<i64: 288, 512>}, {pipeline_mode = #tpu.pipeline_mode<synchronous>, transform_indices = @transform_1, window_bounds = array<i64: 1, 512>}, {pipeline_mode = #tpu.pipeline_mode<synchronous>, transform_indices = @transform_2, window_bounds = array<i64: 1, 512>}, {transform_indices = @transform_3, window_bounds = array<i64: 288, 128>}]} {
    %c0 = arith.constant 0 : index
    %c0_0 = arith.constant 0 : index
    %0 = vector.load %arg1[%c0, %c0_0] : memref<288x512xf32, #tpu.memory_space<vmem>>, vector<288x512xf32>
    %c0_1 = arith.constant 0 : index
    %c0_2 = arith.constant 0 : index
    %1 = vector.load %arg2[%c0_1, %c0_2] : memref<1x512xf32, #tpu.memory_space<vmem>>, vector<1x512xf32>
    %2 = vector.broadcast %1 : vector<1x512xf32> to vector<288x512xf32>
    %3 = arith.mulf %0, %2 : vector<288x512xf32>
    %c0_3 = arith.constant 0 : index
    %c0_4 = arith.constant 0 : index
    %4 = vector.load %arg3[%c0_3, %c0_4] : memref<1x512xf32, #tpu.memory_space<vmem>>, vector<1x512xf32>
    %5 = vector.broadcast %4 : vector<1x512xf32> to vector<288x512xf32>
    %6 = arith.addf %3, %5 : vector<288x512xf32>
    %cst = arith.constant 0.000000e+00 : f32
    %7 = vector.broadcast %cst : f32 to vector<288x512xf32>
    %8 = arith.maximumf %6, %7 : vector<288x512xf32>
    %9 = vector.extract_strided_slice %8 {offsets = [0, 0], sizes = [288, 128], strides = [1, 1]} : vector<288x512xf32> to vector<288x128xf32>
    %10 = vector.extract_strided_slice %8 {offsets = [0, 128], sizes = [288, 128], strides = [1, 1]} : vector<288x512xf32> to vector<288x128xf32>
    %11 = arith.maximumf %9, %10 : vector<288x128xf32>
    %12 = vector.extract_strided_slice %8 {offsets = [0, 256], sizes = [288, 128], strides = [1, 1]} : vector<288x512xf32> to vector<288x128xf32>
    %13 = vector.extract_strided_slice %8 {offsets = [0, 384], sizes = [288, 128], strides = [1, 1]} : vector<288x512xf32> to vector<288x128xf32>
    %14 = arith.maximumf %12, %13 : vector<288x128xf32>
    %15 = arith.maximumf %11, %14 : vector<288x128xf32>
    %c0_5 = arith.constant 0 : index
    %c0_6 = arith.constant 0 : index
    %16 = vector.load %arg4[%c0_5, %c0_6] : memref<288x128xf32, #tpu.memory_space<vmem>>, vector<288x128xf32>
    tpu.vector_store %arg4[%c0_5, %c0_6], %15 {strides = array<i32>} : memref<288x128xf32, #tpu.memory_space<vmem>>, vector<288x128xf32>,
    return
  }
  func.func @transform_0(%arg0: i32) -> (i32, i32) {
    %c0_i32 = arith.constant 0 : i32
    %c0_i32_0 = arith.constant 0 : i32
    return %arg0, %c0_i32 : i32, i32
  }
  func.func @transform_1(%arg0: i32) -> (i32, i32) {
    %c0_i32 = arith.constant 0 : i32
    %c0_i32_0 = arith.constant 0 : i32
    %c0_i32_1 = arith.constant 0 : i32
    return %c0_i32, %c0_i32_0 : i32, i32
  }
  func.func @transform_2(%arg0: i32) -> (i32, i32) {
    %c0_i32 = arith.constant 0 : i32
    %c0_i32_0 = arith.constant 0 : i32
    %c0_i32_1 = arith.constant 0 : i32
    return %c0_i32, %c0_i32_0 : i32, i32
  }
  func.func @transform_3(%arg0: i32) -> (i32, i32) {
    %c0_i32 = arith.constant 0 : i32
    %c0_i32_0 = arith.constant 0 : i32
    return %arg0, %c0_i32 : i32, i32
  }
}

module attributes {stable_mosaic.version = 11 : i64} {
  func.func @conv_stats_kernel(%arg0: i32, %arg1: memref<128x500xbf16, #tpu.memory_space<vmem>>, %arg2: memref<500x128xbf16, #tpu.memory_space<vmem>>, %arg3: memref<128x128xf32, #tpu.memory_space<vmem>>, %arg4: memref<1x1x128xf32, #tpu.memory_space<vmem>>, %arg5: memref<1x1x128xf32, #tpu.memory_space<vmem>>) attributes {dimension_semantics = [#tpu.dimension_semantics<parallel>], iteration_bounds = array<i64: 1>, scalar_prefetch = 0 : i64, scratch_operands = 0 : i64, tpu.core_type = #tpu.core_type<tc>, window_params = [{transform_indices = @transform_0, window_bounds = array<i64: 128, 500>}, {pipeline_mode = #tpu.pipeline_mode<synchronous>, transform_indices = @transform_1, window_bounds = array<i64: 500, 128>}, {transform_indices = @transform_2, window_bounds = array<i64: 128, 128>}, {transform_indices = @transform_3, window_bounds = array<i64: 1, 1, 128>}, {transform_indices = @transform_4, window_bounds = array<i64: 1, 1, 128>}]} {
    %c0 = arith.constant 0 : index
    %c0_0 = arith.constant 0 : index
    %0 = vector.load %arg1[%c0, %c0_0] : memref<128x500xbf16, #tpu.memory_space<vmem>>, vector<128x500xbf16>
    %c0_1 = arith.constant 0 : index
    %c0_2 = arith.constant 0 : index
    %1 = vector.load %arg2[%c0_1, %c0_2] : memref<500x128xbf16, #tpu.memory_space<vmem>>, vector<500x128xbf16>
    %cst = arith.constant dense<0.000000e+00> : vector<128x128xf32>
    %2 = tpu.matmul %0, %1, %cst {dimension_numbers = #tpu.dot_dimension_numbers<[1], [0], [0], [1], [0, 0, 1, 1], [], []>} : vector<128x500xbf16>, vector<500x128xbf16>, vector<128x128xf32> -> vector<128x128xf32>
    %c0_3 = arith.constant 0 : index
    %c0_4 = arith.constant 0 : index
    %3 = vector.load %arg3[%c0_3, %c0_4] : memref<128x128xf32, #tpu.memory_space<vmem>>, vector<128x128xf32>
    tpu.vector_store %arg3[%c0_3, %c0_4], %2 {strides = array<i32>} : memref<128x128xf32, #tpu.memory_space<vmem>>, vector<128x128xf32>,
    %cst_5 = arith.constant dense<0.000000e+00> : vector<128xf32>
    %4 = vector.multi_reduction <add>, %2, %cst_5 [0] : vector<128x128xf32> to vector<128xf32>
    %5 = vector.shape_cast %4 : vector<128xf32> to vector<1x128xf32>
    %6 = vector.shape_cast %5 : vector<1x128xf32> to vector<1x1x128xf32>
    %c0_6 = arith.constant 0 : index
    %c0_7 = arith.constant 0 : index
    %c0_8 = arith.constant 0 : index
    %7 = vector.load %arg4[%c0_6, %c0_7, %c0_8] : memref<1x1x128xf32, #tpu.memory_space<vmem>>, vector<1x1x128xf32>
    tpu.vector_store %arg4[%c0_6, %c0_7, %c0_8], %6 {strides = array<i32>} : memref<1x1x128xf32, #tpu.memory_space<vmem>>, vector<1x1x128xf32>,
    %8 = arith.mulf %2, %2 : vector<128x128xf32>
    %cst_9 = arith.constant dense<0.000000e+00> : vector<128xf32>
    %9 = vector.multi_reduction <add>, %8, %cst_9 [0] : vector<128x128xf32> to vector<128xf32>
    %10 = vector.shape_cast %9 : vector<128xf32> to vector<1x128xf32>
    %11 = vector.shape_cast %10 : vector<1x128xf32> to vector<1x1x128xf32>
    %c0_10 = arith.constant 0 : index
    %c0_11 = arith.constant 0 : index
    %c0_12 = arith.constant 0 : index
    %12 = vector.load %arg5[%c0_10, %c0_11, %c0_12] : memref<1x1x128xf32, #tpu.memory_space<vmem>>, vector<1x1x128xf32>
    tpu.vector_store %arg5[%c0_10, %c0_11, %c0_12], %11 {strides = array<i32>} : memref<1x1x128xf32, #tpu.memory_space<vmem>>, vector<1x1x128xf32>,
    return
  }
  func.func @transform_0(%arg0: i32) -> (i32, i32) {
    %c0_i32 = arith.constant 0 : i32
    %c0_i32_0 = arith.constant 0 : i32
    return %arg0, %c0_i32 : i32, i32
  }
  func.func @transform_1(%arg0: i32) -> (i32, i32) {
    %c0_i32 = arith.constant 0 : i32
    %c0_i32_0 = arith.constant 0 : i32
    %c0_i32_1 = arith.constant 0 : i32
    return %c0_i32, %c0_i32_0 : i32, i32
  }
  func.func @transform_2(%arg0: i32) -> (i32, i32) {
    %c0_i32 = arith.constant 0 : i32
    %c0_i32_0 = arith.constant 0 : i32
    return %arg0, %c0_i32 : i32, i32
  }
  func.func @transform_3(%arg0: i32) -> (i32, i32, i32) {
    %c0_i32 = arith.constant 0 : i32
    %c0_i32_0 = arith.constant 0 : i32
    %c0_i32_1 = arith.constant 0 : i32
    return %arg0, %c0_i32, %c0_i32_0 : i32, i32, i32
  }
  func.func @transform_4(%arg0: i32) -> (i32, i32, i32) {
    %c0_i32 = arith.constant 0 : i32
    %c0_i32_0 = arith.constant 0 : i32
    %c0_i32_1 = arith.constant 0 : i32
    return %arg0, %c0_i32, %c0_i32_0 : i32, i32, i32
  }
}

module attributes {stable_mosaic.version = 11 : i64} {
  func.func @bn_relu_pool_kernel(%arg0: i32, %arg1: memref<32x512xf32, #tpu.memory_space<vmem>>, %arg2: memref<1x512xf32, #tpu.memory_space<vmem>>, %arg3: memref<1x512xf32, #tpu.memory_space<vmem>>, %arg4: memref<32x128xf32, #tpu.memory_space<vmem>>) attributes {dimension_semantics = [#tpu.dimension_semantics<parallel>], iteration_bounds = array<i64: 1>, scalar_prefetch = 0 : i64, scratch_operands = 0 : i64, tpu.core_type = #tpu.core_type<tc>, window_params = [{transform_indices = @transform_0, window_bounds = array<i64: 32, 512>}, {pipeline_mode = #tpu.pipeline_mode<synchronous>, transform_indices = @transform_1, window_bounds = array<i64: 1, 512>}, {pipeline_mode = #tpu.pipeline_mode<synchronous>, transform_indices = @transform_2, window_bounds = array<i64: 1, 512>}, {transform_indices = @transform_3, window_bounds = array<i64: 32, 128>}]} {
    %c0 = arith.constant 0 : index
    %c0_0 = arith.constant 0 : index
    %0 = vector.load %arg1[%c0, %c0_0] : memref<32x512xf32, #tpu.memory_space<vmem>>, vector<32x512xf32>
    %c0_1 = arith.constant 0 : index
    %c0_2 = arith.constant 0 : index
    %1 = vector.load %arg2[%c0_1, %c0_2] : memref<1x512xf32, #tpu.memory_space<vmem>>, vector<1x512xf32>
    %2 = vector.broadcast %1 : vector<1x512xf32> to vector<32x512xf32>
    %3 = arith.mulf %0, %2 : vector<32x512xf32>
    %c0_3 = arith.constant 0 : index
    %c0_4 = arith.constant 0 : index
    %4 = vector.load %arg3[%c0_3, %c0_4] : memref<1x512xf32, #tpu.memory_space<vmem>>, vector<1x512xf32>
    %5 = vector.broadcast %4 : vector<1x512xf32> to vector<32x512xf32>
    %6 = arith.addf %3, %5 : vector<32x512xf32>
    %cst = arith.constant 0.000000e+00 : f32
    %7 = vector.broadcast %cst : f32 to vector<32x512xf32>
    %8 = arith.maximumf %6, %7 : vector<32x512xf32>
    %9 = vector.extract_strided_slice %8 {offsets = [0, 0], sizes = [32, 128], strides = [1, 1]} : vector<32x512xf32> to vector<32x128xf32>
    %10 = vector.extract_strided_slice %8 {offsets = [0, 128], sizes = [32, 128], strides = [1, 1]} : vector<32x512xf32> to vector<32x128xf32>
    %11 = arith.maximumf %9, %10 : vector<32x128xf32>
    %12 = vector.extract_strided_slice %8 {offsets = [0, 256], sizes = [32, 128], strides = [1, 1]} : vector<32x512xf32> to vector<32x128xf32>
    %13 = vector.extract_strided_slice %8 {offsets = [0, 384], sizes = [32, 128], strides = [1, 1]} : vector<32x512xf32> to vector<32x128xf32>
    %14 = arith.maximumf %12, %13 : vector<32x128xf32>
    %15 = arith.maximumf %11, %14 : vector<32x128xf32>
    %c0_5 = arith.constant 0 : index
    %c0_6 = arith.constant 0 : index
    %16 = vector.load %arg4[%c0_5, %c0_6] : memref<32x128xf32, #tpu.memory_space<vmem>>, vector<32x128xf32>
    tpu.vector_store %arg4[%c0_5, %c0_6], %15 {strides = array<i32>} : memref<32x128xf32, #tpu.memory_space<vmem>>, vector<32x128xf32>,
    return
  }
  func.func @transform_0(%arg0: i32) -> (i32, i32) {
    %c0_i32 = arith.constant 0 : i32
    %c0_i32_0 = arith.constant 0 : i32
    return %arg0, %c0_i32 : i32, i32
  }
  func.func @transform_1(%arg0: i32) -> (i32, i32) {
    %c0_i32 = arith.constant 0 : i32
    %c0_i32_0 = arith.constant 0 : i32
    %c0_i32_1 = arith.constant 0 : i32
    return %c0_i32, %c0_i32_0 : i32, i32
  }
  func.func @transform_2(%arg0: i32) -> (i32, i32) {
    %c0_i32 = arith.constant 0 : i32
    %c0_i32_0 = arith.constant 0 : i32
    %c0_i32_1 = arith.constant 0 : i32
    return %c0_i32, %c0_i32_0 : i32, i32
  }
  func.func @transform_3(%arg0: i32) -> (i32, i32) {
    %c0_i32 = arith.constant 0 : i32
    %c0_i32_0 = arith.constant 0 : i32
    return %arg0, %c0_i32 : i32, i32
  }
}

</mosaic_0001>

<llo_original>
// kernel: tile.23
$region0: #{tile.23}
  #allocation0 [shape = 's32[1]{0}', space=sflag, size = 0x4, scoped, tag = 'scoped memory for tile.23']
  %s0 = inlined_call_operand.vmem [shape: f32[128], index: 0, kind: input, shape index: {}]
  %s1 = inlined_call_operand.vmem [shape: f32[4,128], index: 1, kind: output, shape index: {}]
  // Predicated region
  $region2: #{tile.23} parent=0 // pred_check
    _
  $region3: #{tile.23} parent=0 // pred_check_branch
    %3 = sbr.rel (0) target = $region5
  $region4: #{tile.23} parent=0 // pred_region
    _
  $region5: #{tile.23} parent=0 // pred_fallthru
    _
  %v4 = vld [vmem:[%s0] ss:$0 sm:$0xff]
  %5 = vst [vmem:[%s1] sm:$0xf] %v4

// kernel: extractor_gray_forward.4
$region0: #{extractor_gray_forward.4}
  #allocation0 [shape = 'u32[]', space=smem, size = 0x4, offset = 0x4, fixed_abs, tag = 'smem constant byte address 0x4 - core index']
  #allocation1 [shape = 'u32[72,128]{1,0:T(1,128)}', space=vmem, size = 0x9000, scoped, tag = 'internal scratch']
  %s0 = inlined_call_operand.vmem [shape: bf16[1152,25], index: 0, kind: input, shape index: {}]
  %s1 = inlined_call_operand.vmem [shape: bf16[25,128], index: 1, kind: input, shape index: {}]
  %s2 = inlined_call_operand.vmem [shape: f32[1152,128], index: 2, kind: output, shape index: {0}]
  %s3 = inlined_call_operand.vmem [shape: f32[2,1,128], index: 3, kind: output, shape index: {1}]
  %s4 = inlined_call_operand.vmem [shape: f32[2,1,128], index: 4, kind: output, shape index: {2}]
  %5 = xla_tuple %s2, %s3, %s4
  %s6 = sld [smem:[#allocation0]]
  $region57: #{extractor_gray_forward.4} parent=0
    _
  %s8 = ssub.s32 1, %s6
  %s9 = scalar_select 0, %s8, %s6
  loop: start=0, step=1, limit=4
  $region2: #{extractor_gray_forward.4} parent=0 // loop_pre_header
    _
  $region3: #{extractor_gray_forward.4} parent=0 // loop_header
    %s11 = sphi 0, %s15
    %p12 = scmp.ge.s32.totalorder %s11, 4
    %s21 = sphi 0, %s23
    %s24 = sphi 0, %s21
    %s25 = sphi 0, %s24
    %s41 = sphi 0, %s25
    %s45 = sphi 0, %s45
    %s47 = sphi 0, %s45
    %s48 = sphi 0, %s47
    %s62 = sphi 0, %s48
    %s68 = sphi 0, %s70
    %s71 = sphi 0, %s68
    %s72 = sphi 0, %s71
    %s88 = sphi 0, %s72
    %s94 = sphi 0, %s96
    %s97 = sphi 0, %s94
    %s98 = sphi 0, %s97
    %s114 = sphi 0, %s98
    %s120 = sphi 0, %s122
    %s123 = sphi 0, %s120
    %s124 = sphi 0, %s123
    %s140 = sphi 0, %s124
  $region4: #{extractor_gray_forward.4} parent=0 // loop_header_branch
    %14 = sbr.rel (%p12) target = $region8
  $region5: #{extractor_gray_forward.4} parent=0 // loop_body
    %s16 = ssub.s32 %s11, 1
    %s17 = ssub.s32 %s11, 2
    %s18 = sadd.s32 %s11, 1
    %s19 = ssub.s32 %s11, %s18
    %p20 = scmp.eq.s32.totalorder %s19, 0
    %s22 = sadd.s32 %s21, 1
    %s23 = scalar_select %p20, %s21, %s22
    %p26 = pneg %p20
    %p27 = scmp.eq.s32.totalorder %s11, 1
    %p28 = por %p26, %p27
    %p29 = scmp.ne.s32.totalorder %s21, %s24
    %p30 = scmp.eq.s32.totalorder %s11, 0
    %p31 = por %p29, %p30
    %p32 = scmp.ne.s32.totalorder %s21, %s24
    %p33 = scmp.eq.s32.totalorder %s16, 1
    %p34 = por %p32, %p33
    %p35 = scmp.ne.s32.totalorder %s24, %s25
    %p36 = scmp.eq.s32.totalorder %s16, 0
    %p37 = por %p35, %p36
    %p38 = scmp.ne.s32.totalorder %s24, %s25
    %p39 = scmp.eq.s32.totalorder %s17, 1
    %p40 = por %p38, %p39
    %p42 = scmp.ne.s32.totalorder %s25, %s41
    %p43 = scmp.eq.s32.totalorder %s17, 0
    %p44 = por %p42, %p43
    %s46 = sadd.s32 %s45, 1
    %p49 = scmp.eq.s32.totalorder %s11, 1
    %p50 = scmp.ne.s32.totalorder %s45, %s47
    %p51 = scmp.eq.s32.totalorder %s11, 0
    %p52 = por %p50, %p51
    %p53 = scmp.ne.s32.totalorder %s45, %s47
    %p54 = scmp.eq.s32.totalorder %s16, 1
    %p55 = por %p53, %p54
    %p56 = scmp.ne.s32.totalorder %s47, %s48
    %p57 = scmp.eq.s32.totalorder %s16, 0
    %p58 = por %p56, %p57
    %p59 = scmp.ne.s32.totalorder %s47, %s48
    %p60 = scmp.eq.s32.totalorder %s17, 1
    %p61 = por %p59, %p60
    %p63 = scmp.ne.s32.totalorder %s48, %s62
    %p64 = scmp.eq.s32.totalorder %s17, 0
    %p65 = por %p63, %p64
    %s66 = ssub.s32 %s11, %s18
    %p67 = scmp.eq.s32.totalorder %s66, 0
    %s69 = sadd.s32 %s68, 1
    %s70 = scalar_select %p67, %s68, %s69
    %p73 = pneg %p67
    %p74 = scmp.eq.s32.totalorder %s11, 1
    %p75 = por %p73, %p74
    %p76 = scmp.ne.s32.totalorder %s68, %s71
    %p77 = scmp.eq.s32.totalorder %s11, 0
    %p78 = por %p76, %p77
    %p79 = scmp.ne.s32.totalorder %s68, %s71
    %p80 = scmp.eq.s32.totalorder %s16, 1
    %p81 = por %p79, %p80
    %p82 = scmp.ne.s32.totalorder %s71, %s72
    %p83 = scmp.eq.s32.totalorder %s16, 0
    %p84 = por %p82, %p83
    %p85 = scmp.ne.s32.totalorder %s71, %s72
    %p86 = scmp.eq.s32.totalorder %s17, 1
    %p87 = por %p85, %p86
    %p89 = scmp.ne.s32.totalorder %s72, %s88
    %p90 = scmp.eq.s32.totalorder %s17, 0
    %p91 = por %p89, %p90
    %s92 = ssub.s32 %s11, %s18
    %p93 = scmp.eq.s32.totalorder %s92, 0
    %s95 = sadd.s32 %s94, 1
    %s96 = scalar_select %p93, %s94, %s95
    %p99 = pneg %p93
    %p100 = scmp.eq.s32.totalorder %s11, 1
    %p101 = por %p99, %p100
    %p102 = scmp.ne.s32.totalorder %s94, %s97
    %p103 = scmp.eq.s32.totalorder %s11, 0
    %p104 = por %p102, %p103
    %p105 = scmp.ne.s32.totalorder %s94, %s97
    %p106 = scmp.eq.s32.totalorder %s16, 1
    %p107 = por %p105, %p106
    %p108 = scmp.ne.s32.totalorder %s97, %s98
    %p109 = scmp.eq.s32.totalorder %s16, 0
    %p110 = por %p108, %p109
    %p111 = scmp.ne.s32.totalorder %s97, %s98
    %p112 = scmp.eq.s32.totalorder %s17, 1
    %p113 = por %p111, %p112
    %p115 = scmp.ne.s32.totalorder %s98, %s114
    %p116 = scmp.eq.s32.totalorder %s17, 0
    %p117 = por %p115, %p116
    %s118 = ssub.s32 %s11, %s18
    %p119 = scmp.eq.s32.totalorder %s118, 0
    %s121 = sadd.s32 %s120, 1
    %s122 = scalar_select %p119, %s120, %s121
    %p125 = pneg %p119
    %p126 = scmp.eq.s32.totalorder %s11, 1
    %p127 = por %p125, %p126
    %p128 = scmp.ne.s32.totalorder %s120, %s123
    %p129 = scmp.eq.s32.totalorder %s11, 0
    %p130 = por %p128, %p129
    %p131 = scmp.ne.s32.totalorder %s120, %s123
    %p132 = scmp.eq.s32.totalorder %s16, 1
    %p133 = por %p131, %p132
    %p134 = scmp.ne.s32.totalorder %s123, %s124
    %p135 = scmp.eq.s32.totalorder %s16, 0
    %p136 = por %p134, %p135
    %p137 = scmp.ne.s32.totalorder %s123, %s124
    %p138 = scmp.eq.s32.totalorder %s17, 1
    %p139 = por %p137, %p138
    %p141 = scmp.ne.s32.totalorder %s124, %s140
    %p142 = scmp.eq.s32.totalorder %s17, 0
    %p143 = por %p141, %p142
    %p144 = scmp.le.s32.totalorder 1, %s11
    %p145 = scmp.lt.s32.totalorder %s11, 3
    %p146 = pnand %p144, %p145
    %p147 = pneg %p146
    // Predicated region
    $region9: #{extractor_gray_forward.4} parent=5 // pred_check
      _
    $region10: #{extractor_gray_forward.4} parent=5 // pred_check_branch
      %149 = sbr.rel (%p146) target = $region12
    $region11: #{extractor_gray_forward.4} parent=5 // pred_region
      %s150 = ssub.s32 %s11, 1
      // Predicated region
      $region13: #{extractor_gray_forward.4} parent=11 // pred_check
        %p151 = pneg %p58
      $region14: #{extractor_gray_forward.4} parent=11 // pred_check_branch
        %153 = sbr.rel (%p151) target = $region16
      $region15: #{extractor_gray_forward.4} parent=11 // pred_region
        _
      $region16: #{extractor_gray_forward.4} parent=11 // pred_fallthru
        _
    $region12: #{extractor_gray_forward.4} parent=5 // pred_fallthru
      _
    %p154 = scmp.lt.s32.totalorder %s11, 2
    // Predicated region
    $region17: #{extractor_gray_forward.4} parent=5 // pred_check
      %p155 = pneg %p154
    $region18: #{extractor_gray_forward.4} parent=5 // pred_check_branch
      %157 = sbr.rel (%p155) target = $region20
    $region19: #{extractor_gray_forward.4} parent=5 // pred_region
      // Predicated region
      $region21: #{extractor_gray_forward.4} parent=19 // pred_check
        %p158 = pneg %p31
      $region22: #{extractor_gray_forward.4} parent=19 // pred_check_branch
        %160 = sbr.rel (%p158) target = $region24
      $region23: #{extractor_gray_forward.4} parent=19 // pred_region
        %s161 = smul.u32 72, %s11
        %p162 = scmp.lt.s32.totalorder %s161, 143
        %s163 = scalar_select %p162, %s161, 143
        %s164 = smul.addr %s163, 4
        %s165 = scalar_lea.vmem %s0, %s164
        %s166 = smul.u32 72, %s11
      $region24: #{extractor_gray_forward.4} parent=19 // pred_fallthru
        _
    $region20: #{extractor_gray_forward.4} parent=5 // pred_fallthru
      _
    %p167 = scmp.le.s32.totalorder 1, %s11
    %p168 = scmp.lt.s32.totalorder %s11, 3
    %p169 = pnand %p167, %p168
    %p170 = pneg %p169
    // Predicated region
    $region25: #{extractor_gray_forward.4} parent=5 // pred_check
      _
    $region26: #{extractor_gray_forward.4} parent=5 // pred_check_branch
      %172 = sbr.rel (%p169) target = $region28
    $region27: #{extractor_gray_forward.4} parent=5 // pred_region
      %s173 = ssub.s32 %s11, 1
      %s174 = smul.u32 72, %s16
      %p175 = scmp.lt.s32.totalorder %s174, 143
      %s176 = scalar_select %p175, %s174, 143
      %s177 = smul.addr %s176, 4
      %s178 = scalar_lea.vmem %s0, %s177
      %p179 = pneg %p37
      %p180 = pneg %p34
      %p181 = pneg %p58
      %p182 = pneg %p55
      %p183 = pneg %p84
      %p184 = pneg %p81
      %s185 = smul.u32 72, %s16
      %p186 = scmp.lt.s32.totalorder %s185, 143
      %s187 = scalar_select %p186, %s185, 143
      %s188 = smul.addr %s187, 8
      %s189 = scalar_lea.vmem %s2, %s188
      %p190 = pneg %p110
      %p191 = pneg %p107
      %p192 = scmp.lt.s32.totalorder %s16, 1
      %s193 = scalar_select %p192, %s16, 1
      %s194 = scalar_lea.vmem %s3, %s193
      %p195 = pneg %p136
      %p196 = pneg %p133
      %p197 = scmp.lt.s32.totalorder %s16, 1
      %s198 = scalar_select %p197, %s16, 1
      %s199 = scalar_lea.vmem %s4, %s198
      %s200 = smul.u32 72, %s16
      %p201 = scmp.lt.s32.totalorder %s200, 143
      %s202 = scalar_select %p201, %s200, 143
      %s203 = smul.addr %s202, 4
      %s204 = scalar_lea.vmem %s0, %s203
      %s205 = smul.u32 72, %s16
      %s206 = smul.u32 72, %s16
      %p207 = scmp.lt.s32.totalorder %s206, 143
      %s208 = scalar_select %p207, %s206, 143
      %s209 = smul.addr %s208, 8
      %s210 = scalar_lea.vmem %s2, %s209
      %s211 = smul.u32 72, %s16
      %p212 = scmp.lt.s32.totalorder %s16, 1
      %s213 = scalar_select %p212, %s16, 1
      %s214 = scalar_lea.vmem %s3, %s213
      %p215 = scmp.lt.s32.totalorder %s16, 1
      %s216 = scalar_select %p215, %s16, 1
      %s217 = scalar_lea.vmem %s4, %s216
      %v219 = vld [vmem:[%s204] sm:$0xf]
      %v220 = vld [vmem:[%s204 + $0x4] sm:$0xf]
      %v221 = vld [vmem:[%s204 + $0x8] sm:$0xf]
      %v222 = vld [vmem:[%s204 + $0xc] sm:$0xf]
      %v223 = vld [vmem:[%s204 + $0x10] sm:$0xf]
      %v224 = vld [vmem:[%s204 + $0x14] sm:$0xf]
      %v225 = vld [vmem:[%s204 + $0x18] sm:$0xf]
      %v226 = vld [vmem:[%s204 + $0x1c] sm:$0xf]
      %v227 = vld [vmem:[%s204 + $0x20] sm:$0xf]
      %v228 = vld [vmem:[%s204 + $0x24] sm:$0xf]
      %v229 = vld [vmem:[%s204 + $0x28] sm:$0xf]
      %v230 = vld [vmem:[%s204 + $0x2c] sm:$0xf]
      %v231 = vld [vmem:[%s204 + $0x30] sm:$0xf]
      %v232 = vld [vmem:[%s204 + $0x34] sm:$0xf]
      %v233 = vld [vmem:[%s204 + $0x38] sm:$0xf]
      %v234 = vld [vmem:[%s204 + $0x3c] sm:$0xf]
      %v235 = vld [vmem:[%s204 + $0x40] sm:$0xf]
      %v236 = vld [vmem:[%s204 + $0x44] sm:$0xf]
      %v237 = vld [vmem:[%s204 + $0x48] sm:$0xf]
      %v238 = vld [vmem:[%s204 + $0x4c] sm:$0xf]
      %v239 = vld [vmem:[%s204 + $0x50] sm:$0xf]
      %v240 = vld [vmem:[%s204 + $0x54] sm:$0xf]
      %v241 = vld [vmem:[%s204 + $0x58] sm:$0xf]
      %v242 = vld [vmem:[%s204 + $0x5c] sm:$0xf]
      %v243 = vld [vmem:[%s204 + $0x60] sm:$0xf]
      %v244 = vld [vmem:[%s204 + $0x64] sm:$0xf]
      %v245 = vld [vmem:[%s204 + $0x68] sm:$0xf]
      %v246 = vld [vmem:[%s204 + $0x6c] sm:$0xf]
      %v247 = vld [vmem:[%s204 + $0x70] sm:$0xf]
      %v248 = vld [vmem:[%s204 + $0x74] sm:$0xf]
      %v249 = vld [vmem:[%s204 + $0x78] sm:$0xf]
      %v250 = vld [vmem:[%s204 + $0x7c] sm:$0xf]
      %v251 = vld [vmem:[%s204 + $0x80] sm:$0xf]
      %v252 = vld [vmem:[%s204 + $0x84] sm:$0xf]
      %v253 = vld [vmem:[%s204 + $0x88] sm:$0xf]
      %v254 = vld [vmem:[%s204 + $0x8c] sm:$0xf]
      %v255 = vld [vmem:[%s204 + $0x90] sm:$0xf]
      %v256 = vld [vmem:[%s204 + $0x94] sm:$0xf]
      %v257 = vld [vmem:[%s204 + $0x98] sm:$0xf]
      %v258 = vld [vmem:[%s204 + $0x9c] sm:$0xf]
      %v259 = vld [vmem:[%s204 + $0xa0] sm:$0xf]
      %v260 = vld [vmem:[%s204 + $0xa4] sm:$0xf]
      %v261 = vld [vmem:[%s204 + $0xa8] sm:$0xf]
      %v262 = vld [vmem:[%s204 + $0xac] sm:$0xf]
      %v263 = vld [vmem:[%s204 + $0xb0] sm:$0xf]
      %v264 = vld [vmem:[%s204 + $0xb4] sm:$0xf]
      %v265 = vld [vmem:[%s204 + $0xb8] sm:$0xf]
      %v266 = vld [vmem:[%s204 + $0xbc] sm:$0xf]
      %v267 = vld [vmem:[%s204 + $0xc0] sm:$0xf]
      %v268 = vld [vmem:[%s204 + $0xc4] sm:$0xf]
      %v269 = vld [vmem:[%s204 + $0xc8] sm:$0xf]
      %v270 = vld [vmem:[%s204 + $0xcc] sm:$0xf]
      %v271 = vld [vmem:[%s204 + $0xd0] sm:$0xf]
      %v272 = vld [vmem:[%s204 + $0xd4] sm:$0xf]
      %v273 = vld [vmem:[%s204 + $0xd8] sm:$0xf]
      %v274 = vld [vmem:[%s204 + $0xdc] sm:$0xf]
      %v275 = vld [vmem:[%s204 + $0xe0] sm:$0xf]
      %v276 = vld [vmem:[%s204 + $0xe4] sm:$0xf]
      %v277 = vld [vmem:[%s204 + $0xe8] sm:$0xf]
      %v278 = vld [vmem:[%s204 + $0xec] sm:$0xf]
      %v279 = vld [vmem:[%s204 + $0xf0] sm:$0xf]
      %v280 = vld [vmem:[%s204 + $0xf4] sm:$0xf]
      %v281 = vld [vmem:[%s204 + $0xf8] sm:$0xf]
      %v282 = vld [vmem:[%s204 + $0xfc] sm:$0xf]
      %v283 = vld [vmem:[%s204 + $0x100] sm:$0xf]
      %v284 = vld [vmem:[%s204 + $0x104] sm:$0xf]
      %v285 = vld [vmem:[%s204 + $0x108] sm:$0xf]
      %v286 = vld [vmem:[%s204 + $0x10c] sm:$0xf]
      %v287 = vld [vmem:[%s204 + $0x110] sm:$0xf]
      %v288 = vld [vmem:[%s204 + $0x114] sm:$0xf]
      %v289 = vld [vmem:[%s204 + $0x118] sm:$0xf]
      %v290 = vld [vmem:[%s204 + $0x11c] sm:$0xf]
      %v291 = vld [vmem:[%s1] sm:$0xf]
      %v292 = vld [vmem:[%s1 + $0x4] sm:$0xf]
      %v293 = vld [vmem:[%s1 + $0x8] sm:$0xf]
      %v294 = vld [vmem:[%s1 + $0xc] sm:$0x1]
      %v367 = vunpack.c.l.b16 %v219
      %v368 = vunpack.c.l.b16 %v220
      %v369 = vunpack.c.l.b16 %v221
      %v370 = vunpack.c.l.b16 %v222
      %v371 = vunpack.c.l.b16 %v223
      %v372 = vunpack.c.l.b16 %v224
      %v373 = vunpack.c.l.b16 %v225
      %v374 = vunpack.c.l.b16 %v226
      %v375 = vunpack.c.l.b16 %v227
      %v376 = vunpack.c.l.b16 %v228
      %v377 = vunpack.c.l.b16 %v229
      %v378 = vunpack.c.l.b16 %v230
      %v379 = vunpack.c.l.b16 %v231
      %v380 = vunpack.c.l.b16 %v232
      %v381 = vunpack.c.l.b16 %v233
      %v382 = vunpack.c.l.b16 %v234
      %v383 = vunpack.c.l.b16 %v235
      %v384 = vunpack.c.l.b16 %v236
      %v385 = vunpack.c.l.b16 %v237
      %v386 = vunpack.c.l.b16 %v238
      %v387 = vunpack.c.l.b16 %v239
      %v388 = vunpack.c.l.b16 %v240
      %v389 = vunpack.c.l.b16 %v241
      %v390 = vunpack.c.l.b16 %v242
      %v391 = vunpack.c.l.b16 %v243
      %v392 = vunpack.c.l.b16 %v244
      %v393 = vunpack.c.l.b16 %v245
      %v394 = vunpack.c.l.b16 %v246
      %v395 = vunpack.c.l.b16 %v247
      %v396 = vunpack.c.l.b16 %v248
      %v397 = vunpack.c.l.b16 %v249
      %v398 = vunpack.c.l.b16 %v250
      %v399 = vunpack.c.l.b16 %v251
      %v400 = vunpack.c.l.b16 %v252
      %v401 = vunpack.c.l.b16 %v253
      %v402 = vunpack.c.l.b16 %v254
      %v403 = vunpack.c.l.b16 %v255
      %v404 = vunpack.c.l.b16 %v256
      %v405 = vunpack.c.l.b16 %v257
      %v406 = vunpack.c.l.b16 %v258
      %v407 = vunpack.c.l.b16 %v259
      %v408 = vunpack.c.l.b16 %v260
      %v409 = vunpack.c.l.b16 %v261
      %v410 = vunpack.c.l.b16 %v262
      %v411 = vunpack.c.l.b16 %v263
      %v412 = vunpack.c.l.b16 %v264
      %v413 = vunpack.c.l.b16 %v265
      %v414 = vunpack.c.l.b16 %v266
      %v415 = vunpack.c.l.b16 %v267
      %v416 = vunpack.c.l.b16 %v268
      %v417 = vunpack.c.l.b16 %v269
      %v418 = vunpack.c.l.b16 %v270
      %v419 = vunpack.c.l.b16 %v271
      %v420 = vunpack.c.l.b16 %v272
      %v421 = vunpack.c.l.b16 %v273
      %v422 = vunpack.c.l.b16 %v274
      %v423 = vunpack.c.l.b16 %v275
      %v424 = vunpack.c.l.b16 %v276
      %v425 = vunpack.c.l.b16 %v277
      %v426 = vunpack.c.l.b16 %v278
      %v427 = vunpack.c.l.b16 %v279
      %v428 = vunpack.c.l.b16 %v280
      %v429 = vunpack.c.l.b16 %v281
      %v430 = vunpack.c.l.b16 %v282
      %v431 = vunpack.c.l.b16 %v283
      %v432 = vunpack.c.l.b16 %v284
      %v433 = vunpack.c.l.b16 %v285
      %v434 = vunpack.c.l.b16 %v286
      %v435 = vunpack.c.l.b16 %v287
      %v436 = vunpack.c.l.b16 %v288
      %v437 = vunpack.c.l.b16 %v289
      %v438 = vunpack.c.l.b16 %v290
      %v439 = vpack.c.b16 %v368, %v367
      %v440 = vpack.c.b16 %v370, %v369
      %v441 = vpack.c.b16 %v372, %v371
      %v442 = vpack.c.b16 %v374, %v373
      %v443 = vpack.c.b16 %v376, %v375
      %v444 = vpack.c.b16 %v378, %v377
      %v445 = vpack.c.b16 %v380, %v379
      %v446 = vpack.c.b16 %v382, %v381
      %v447 = vpack.c.b16 %v384, %v383
      %v448 = vpack.c.b16 %v386, %v385
      %v449 = vpack.c.b16 %v388, %v387
      %v450 = vpack.c.b16 %v390, %v389
      %v451 = vpack.c.b16 %v392, %v391
      %v452 = vpack.c.b16 %v394, %v393
      %v453 = vpack.c.b16 %v396, %v395
      %v454 = vpack.c.b16 %v398, %v397
      %v455 = vpack.c.b16 %v400, %v399
      %v456 = vpack.c.b16 %v402, %v401
      %v457 = vpack.c.b16 %v404, %v403
      %v458 = vpack.c.b16 %v406, %v405
      %v459 = vpack.c.b16 %v408, %v407
      %v460 = vpack.c.b16 %v410, %v409
      %v461 = vpack.c.b16 %v412, %v411
      %v462 = vpack.c.b16 %v414, %v413
      %v463 = vpack.c.b16 %v416, %v415
      %v464 = vpack.c.b16 %v418, %v417
      %v465 = vpack.c.b16 %v420, %v419
      %v466 = vpack.c.b16 %v422, %v421
      %v467 = vpack.c.b16 %v424, %v423
      %v468 = vpack.c.b16 %v426, %v425
      %v469 = vpack.c.b16 %v428, %v427
      %v470 = vpack.c.b16 %v430, %v429
      %v471 = vpack.c.b16 %v432, %v431
      %v472 = vpack.c.b16 %v434, %v433
      %v473 = vpack.c.b16 %v436, %v435
      %v474 = vpack.c.b16 %v438, %v437
      %v479 = vunpack.c.l.b16 %v291
      %v480 = vunpack.c.l.b16 %v292
      %v481 = vunpack.c.l.b16 %v293
      %v482 = vunpack.c.l.b16 %v294
      %v483 = vpack.c.b16 %v480, %v479
      %v484 = vpack.c.b16 %v482, %v481
      %vm486 = vcmask 203776
      %v488 = vsel %vm486, %v439, 0
      %v491 = vsel %vm486, %v440, 0
      %v494 = vsel %vm486, %v441, 0
      %v497 = vsel %vm486, %v442, 0
      %v500 = vsel %vm486, %v443, 0
      %v503 = vsel %vm486, %v444, 0
      %v506 = vsel %vm486, %v445, 0
      %v509 = vsel %vm486, %v446, 0
      %v512 = vsel %vm486, %v447, 0
      %v515 = vsel %vm486, %v448, 0
      %v518 = vsel %vm486, %v449, 0
      %v521 = vsel %vm486, %v450, 0
      %v524 = vsel %vm486, %v451, 0
      %v527 = vsel %vm486, %v452, 0
      %v530 = vsel %vm486, %v453, 0
      %v533 = vsel %vm486, %v454, 0
      %v536 = vsel %vm486, %v455, 0
      %v539 = vsel %vm486, %v456, 0
      %v542 = vsel %vm486, %v457, 0
      %v545 = vsel %vm486, %v458, 0
      %v548 = vsel %vm486, %v459, 0
      %v551 = vsel %vm486, %v460, 0
      %v554 = vsel %vm486, %v461, 0
      %v557 = vsel %vm486, %v462, 0
      %v560 = vsel %vm486, %v463, 0
      %v563 = vsel %vm486, %v464, 0
      %v566 = vsel %vm486, %v465, 0
      %v569 = vsel %vm486, %v466, 0
      %v572 = vsel %vm486, %v467, 0
      %v575 = vsel %vm486, %v468, 0
      %v578 = vsel %vm486, %v469, 0
      %v581 = vsel %vm486, %v470, 0
      %v584 = vsel %vm486, %v471, 0
      %v587 = vsel %vm486, %v472, 0
      %v590 = vsel %vm486, %v473, 0
      %v593 = vsel %vm486, %v474, 0
      %vm595 = vcmask 1043456
      %vm596 = vcmask 1044480
      %v597 = vsel %vm595, 4294967295, 65535
      %v598 = vsel %vm596, %v597, 0
      %v600 = vand.u32 %v484, %v598
      %602 = vmatpush.bf16.msra.mxu0 0
      %603 = vmatpush.bf16.msra.mxu0 0
      %604 = vmatpush.bf16.msra.mxu0 0
      %605 = vmatpush.bf16.msra.mxu0 0
      %606 = vmatpush.bf16.msra.mxu0 0
      %607 = vmatpush.bf16.msra.mxu0 0
      %608 = vmatpush.bf16.msra.mxu0 %v600
      %609 = vmatpush.bf16.msra.mxu0 %v483
      %610 = vmatmul.bf16.gmra.mxu0 %v488
      %v611 = vpop.f32.mrf.mxu0
      %v612 = vadd.f32 0.0, %v611
      %v613 = vpop.f32.mrf.mxu0
      %v614 = vadd.f32 0.0, %v613
      %615 = vmatmul.bf16.gmra.mxu0 %v491
      %v616 = vpop.f32.mrf.mxu0
      %v617 = vadd.f32 0.0, %v616
      %v618 = vpop.f32.mrf.mxu0
      %v619 = vadd.f32 0.0, %v618
      %620 = vmatmul.bf16.gmra.mxu0 %v494
      %v621 = vpop.f32.mrf.mxu0
      %v622 = vadd.f32 0.0, %v621
      %v623 = vpop.f32.mrf.mxu0
      %v624 = vadd.f32 0.0, %v623
      %625 = vmatmul.bf16.gmra.mxu0 %v497
      %v626 = vpop.f32.mrf.mxu0
      %v627 = vadd.f32 0.0, %v626
      %v628 = vpop.f32.mrf.mxu0
      %v629 = vadd.f32 0.0, %v628
      %630 = vmatmul.bf16.gmra.mxu0 %v500
      %v631 = vpop.f32.mrf.mxu0
      %v632 = vadd.f32 0.0, %v631
      %v633 = vpop.f32.mrf.mxu0
      %v634 = vadd.f32 0.0, %v633
      %635 = vmatmul.bf16.gmra.mxu0 %v503
      %v636 = vpop.f32.mrf.mxu0
      %v637 = vadd.f32 0.0, %v636
      %v638 = vpop.f32.mrf.mxu0
      %v639 = vadd.f32 0.0, %v638
      %640 = vmatmul.bf16.gmra.mxu0 %v506
      %v641 = vpop.f32.mrf.mxu0
      %v642 = vadd.f32 0.0, %v641
      %v643 = vpop.f32.mrf.mxu0
      %v644 = vadd.f32 0.0, %v643
      %645 = vmatmul.bf16.gmra.mxu0 %v509
      %v646 = vpop.f32.mrf.mxu0
      %v647 = vadd.f32 0.0, %v646
      %v648 = vpop.f32.mrf.mxu0
      %v649 = vadd.f32 0.0, %v648
      %650 = vmatmul.bf16.gmra.mxu0 %v512
      %v651 = vpop.f32.mrf.mxu0
      %v652 = vadd.f32 0.0, %v651
      %v653 = vpop.f32.mrf.mxu0
      %v654 = vadd.f32 0.0, %v653
      %655 = vmatmul.bf16.gmra.mxu0 %v515
      %v656 = vpop.f32.mrf.mxu0
      %v657 = vadd.f32 0.0, %v656
      %v658 = vpop.f32.mrf.mxu0
      %v659 = vadd.f32 0.0, %v658
      %660 = vmatmul.bf16.gmra.mxu0 %v518
      %v661 = vpop.f32.mrf.mxu0
      %v662 = vadd.f32 0.0, %v661
      %v663 = vpop.f32.mrf.mxu0
      %v664 = vadd.f32 0.0, %v663
      %665 = vmatmul.bf16.gmra.mxu0 %v521
      %v666 = vpop.f32.mrf.mxu0
      %v667 = vadd.f32 0.0, %v666
      %v668 = vpop.f32.mrf.mxu0
      %v669 = vadd.f32 0.0, %v668
      %670 = vmatmul.bf16.gmra.mxu0 %v524
      %v671 = vpop.f32.mrf.mxu0
      %v672 = vadd.f32 0.0, %v671
      %v673 = vpop.f32.mrf.mxu0
      %v674 = vadd.f32 0.0, %v673
      %675 = vmatmul.bf16.gmra.mxu0 %v527
      %v676 = vpop.f32.mrf.mxu0
      %v677 = vadd.f32 0.0, %v676
      %v678 = vpop.f32.mrf.mxu0
      %v679 = vadd.f32 0.0, %v678
      %680 = vmatmul.bf16.gmra.mxu0 %v530
      %v681 = vpop.f32.mrf.mxu0
      %v682 = vadd.f32 0.0, %v681
      %v683 = vpop.f32.mrf.mxu0
      %v684 = vadd.f32 0.0, %v683
      %685 = vmatmul.bf16.gmra.mxu0 %v533
      %v686 = vpop.f32.mrf.mxu0
      %v687 = vadd.f32 0.0, %v686
      %v688 = vpop.f32.mrf.mxu0
      %v689 = vadd.f32 0.0, %v688
      %690 = vmatmul.bf16.gmra.mxu0 %v536
      %v691 = vpop.f32.mrf.mxu0
      %v692 = vadd.f32 0.0, %v691
      %v693 = vpop.f32.mrf.mxu0
      %v694 = vadd.f32 0.0, %v693
      %695 = vmatmul.bf16.gmra.mxu0 %v539
      %v696 = vpop.f32.mrf.mxu0
      %v697 = vadd.f32 0.0, %v696
      %v698 = vpop.f32.mrf.mxu0
      %v699 = vadd.f32 0.0, %v698
      %700 = vmatmul.bf16.gmra.mxu0 %v542
      %v701 = vpop.f32.mrf.mxu0
      %v702 = vadd.f32 0.0, %v701
      %v703 = vpop.f32.mrf.mxu0
      %v704 = vadd.f32 0.0, %v703
      %705 = vmatmul.bf16.gmra.mxu0 %v545
      %v706 = vpop.f32.mrf.mxu0
      %v707 = vadd.f32 0.0, %v706
      %v708 = vpop.f32.mrf.mxu0
      %v709 = vadd.f32 0.0, %v708
      %710 = vmatmul.bf16.gmra.mxu0 %v548
      %v711 = vpop.f32.mrf.mxu0
      %v712 = vadd.f32 0.0, %v711
      %v713 = vpop.f32.mrf.mxu0
      %v714 = vadd.f32 0.0, %v713
      %715 = vmatmul.bf16.gmra.mxu0 %v551
      %v716 = vpop.f32.mrf.mxu0
      %v717 = vadd.f32 0.0, %v716
      %v718 = vpop.f32.mrf.mxu0
      %v719 = vadd.f32 0.0, %v718
      %720 = vmatmul.bf16.gmra.mxu0 %v554
      %v721 = vpop.f32.mrf.mxu0
      %v722 = vadd.f32 0.0, %v721
      %v723 = vpop.f32.mrf.mxu0
      %v724 = vadd.f32 0.0, %v723
      %725 = vmatmul.bf16.gmra.mxu0 %v557
      %v726 = vpop.f32.mrf.mxu0
      %v727 = vadd.f32 0.0, %v726
      %v728 = vpop.f32.mrf.mxu0
      %v729 = vadd.f32 0.0, %v728
      %730 = vmatmul.bf16.gmra.mxu0 %v560
      %v731 = vpop.f32.mrf.mxu0
      %v732 = vadd.f32 0.0, %v731
      %v733 = vpop.f32.mrf.mxu0
      %v734 = vadd.f32 0.0, %v733
      %735 = vmatmul.bf16.gmra.mxu0 %v563
      %v736 = vpop.f32.mrf.mxu0
      %v737 = vadd.f32 0.0, %v736
      %v738 = vpop.f32.mrf.mxu0
      %v739 = vadd.f32 0.0, %v738
      %740 = vmatmul.bf16.gmra.mxu0 %v566
      %v741 = vpop.f32.mrf.mxu0
      %v742 = vadd.f32 0.0, %v741
      %v743 = vpop.f32.mrf.mxu0
      %v744 = vadd.f32 0.0, %v743
      %745 = vmatmul.bf16.gmra.mxu0 %v569
      %v746 = vpop.f32.mrf.mxu0
      %v747 = vadd.f32 0.0, %v746
      %v748 = vpop.f32.mrf.mxu0
      %v749 = vadd.f32 0.0, %v748
      %750 = vmatmul.bf16.gmra.mxu0 %v572
      %v751 = vpop.f32.mrf.mxu0
      %v752 = vadd.f32 0.0, %v751
      %v753 = vpop.f32.mrf.mxu0
      %v754 = vadd.f32 0.0, %v753
      %755 = vmatmul.bf16.gmra.mxu0 %v575
      %v756 = vpop.f32.mrf.mxu0
      %v757 = vadd.f32 0.0, %v756
      %v758 = vpop.f32.mrf.mxu0
      %v759 = vadd.f32 0.0, %v758
      %760 = vmatmul.bf16.gmra.mxu0 %v578
      %v761 = vpop.f32.mrf.mxu0
      %v762 = vadd.f32 0.0, %v761
      %v763 = vpop.f32.mrf.mxu0
      %v764 = vadd.f32 0.0, %v763
      %765 = vmatmul.bf16.gmra.mxu0 %v581
      %v766 = vpop.f32.mrf.mxu0
      %v767 = vadd.f32 0.0, %v766
      %v768 = vpop.f32.mrf.mxu0
      %v769 = vadd.f32 0.0, %v768
      %770 = vmatmul.bf16.gmra.mxu0 %v584
      %v771 = vpop.f32.mrf.mxu0
      %v772 = vadd.f32 0.0, %v771
      %v773 = vpop.f32.mrf.mxu0
      %v774 = vadd.f32 0.0, %v773
      %775 = vmatmul.bf16.gmra.mxu0 %v587
      %v776 = vpop.f32.mrf.mxu0
      %v777 = vadd.f32 0.0, %v776
      %v778 = vpop.f32.mrf.mxu0
      %v779 = vadd.f32 0.0, %v778
      %780 = vmatmul.bf16.gmra.mxu0 %v590
      %v781 = vpop.f32.mrf.mxu0
      %v782 = vadd.f32 0.0, %v781
      %v783 = vpop.f32.mrf.mxu0
      %v784 = vadd.f32 0.0, %v783
      %785 = vmatmul.bf16.gmra.mxu0 %v593
      %v786 = vpop.f32.mrf.mxu0
      %v787 = vadd.f32 0.0, %v786
      %v788 = vpop.f32.mrf.mxu0
      %v789 = vadd.f32 0.0, %v788
      %790 = vdwg.mxu0
      %791 = vst [vmem:[%s210] sm:$0xff] %v612
      %792 = vst [vmem:[%s210 + $0x8] sm:$0xff] %v614
      %793 = vst [vmem:[%s210 + $0x10] sm:$0xff] %v617
      %794 = vst [vmem:[%s210 + $0x18] sm:$0xff] %v619
      %795 = vst [vmem:[%s210 + $0x20] sm:$0xff] %v622
      %796 = vst [vmem:[%s210 + $0x28] sm:$0xff] %v624
      %797 = vst [vmem:[%s210 + $0x30] sm:$0xff] %v627
      %798 = vst [vmem:[%s210 + $0x38] sm:$0xff] %v629
      %799 = vst [vmem:[%s210 + $0x40] sm:$0xff] %v632
      %800 = vst [vmem:[%s210 + $0x48] sm:$0xff] %v634
      %801 = vst [vmem:[%s210 + $0x50] sm:$0xff] %v637
      %802 = vst [vmem:[%s210 + $0x58] sm:$0xff] %v639
      %803 = vst [vmem:[%s210 + $0x60] sm:$0xff] %v642
      %804 = vst [vmem:[%s210 + $0x68] sm:$0xff] %v644
      %805 = vst [vmem:[%s210 + $0x70] sm:$0xff] %v647
      %806 = vst [vmem:[%s210 + $0x78] sm:$0xff] %v649
      %807 = vst [vmem:[%s210 + $0x80] sm:$0xff] %v652
      %808 = vst [vmem:[%s210 + $0x88] sm:$0xff] %v654
      %809 = vst [vmem:[%s210 + $0x90] sm:$0xff] %v657
      %810 = vst [vmem:[%s210 + $0x98] sm:$0xff] %v659
      %811 = vst [vmem:[%s210 + $0xa0] sm:$0xff] %v662
      %812 = vst [vmem:[%s210 + $0xa8] sm:$0xff] %v664
      %813 = vst [vmem:[%s210 + $0xb0] sm:$0xff] %v667
      %814 = vst [vmem:[%s210 + $0xb8] sm:$0xff] %v669
      %815 = vst [vmem:[%s210 + $0xc0] sm:$0xff] %v672
      %816 = vst [vmem:[%s210 + $0xc8] sm:$0xff] %v674
      %817 = vst [vmem:[%s210 + $0xd0] sm:$0xff] %v677
      %818 = vst [vmem:[%s210 + $0xd8] sm:$0xff] %v679
      %819 = vst [vmem:[%s210 + $0xe0] sm:$0xff] %v682
      %820 = vst [vmem:[%s210 + $0xe8] sm:$0xff] %v684
      %821 = vst [vmem:[%s210 + $0xf0] sm:$0xff] %v687
      %822 = vst [vmem:[%s210 + $0xf8] sm:$0xff] %v689
      %823 = vst [vmem:[%s210 + $0x100] sm:$0xff] %v692
      %824 = vst [vmem:[%s210 + $0x108] sm:$0xff] %v694
      %825 = vst [vmem:[%s210 + $0x110] sm:$0xff] %v697
      %826 = vst [vmem:[%s210 + $0x118] sm:$0xff] %v699
      %827 = vst [vmem:[%s210 + $0x120] sm:$0xff] %v702
      %828 = vst [vmem:[%s210 + $0x128] sm:$0xff] %v704
      %829 = vst [vmem:[%s210 + $0x130] sm:$0xff] %v707
      %830 = vst [vmem:[%s210 + $0x138] sm:$0xff] %v709
      %831 = vst [vmem:[%s210 + $0x140] sm:$0xff] %v712
      %832 = vst [vmem:[%s210 + $0x148] sm:$0xff] %v714
      %833 = vst [vmem:[%s210 + $0x150] sm:$0xff] %v717
      %834 = vst [vmem:[%s210 + $0x158] sm:$0xff] %v719
      %835 = vst [vmem:[%s210 + $0x160] sm:$0xff] %v722
      %836 = vst [vmem:[%s210 + $0x168] sm:$0xff] %v724
      %837 = vst [vmem:[%s210 + $0x170] sm:$0xff] %v727
      %838 = vst [vmem:[%s210 + $0x178] sm:$0xff] %v729
      %839 = vst [vmem:[%s210 + $0x180] sm:$0xff] %v732
      %840 = vst [vmem:[%s210 + $0x188] sm:$0xff] %v734
      %841 = vst [vmem:[%s210 + $0x190] sm:$0xff] %v737
      %842 = vst [vmem:[%s210 + $0x198] sm:$0xff] %v739
      %843 = vst [vmem:[%s210 + $0x1a0] sm:$0xff] %v742
      %844 = vst [vmem:[%s210 + $0x1a8] sm:$0xff] %v744
      %845 = vst [vmem:[%s210 + $0x1b0] sm:$0xff] %v747
      %846 = vst [vmem:[%s210 + $0x1b8] sm:$0xff] %v749
      %847 = vst [vmem:[%s210 + $0x1c0] sm:$0xff] %v752
      %848 = vst [vmem:[%s210 + $0x1c8] sm:$0xff] %v754
      %849 = vst [vmem:[%s210 + $0x1d0] sm:$0xff] %v757
      %850 = vst [vmem:[%s210 + $0x1d8] sm:$0xff] %v759
      %851 = vst [vmem:[%s210 + $0x1e0] sm:$0xff] %v762
      %852 = vst [vmem:[%s210 + $0x1e8] sm:$0xff] %v764
      %853 = vst [vmem:[%s210 + $0x1f0] sm:$0xff] %v767
      %854 = vst [vmem:[%s210 + $0x1f8] sm:$0xff] %v769
      %855 = vst [vmem:[%s210 + $0x200] sm:$0xff] %v772
      %856 = vst [vmem:[%s210 + $0x208] sm:$0xff] %v774
      %857 = vst [vmem:[%s210 + $0x210] sm:$0xff] %v777
      %858 = vst [vmem:[%s210 + $0x218] sm:$0xff] %v779
      %859 = vst [vmem:[%s210 + $0x220] sm:$0xff] %v782
      %860 = vst [vmem:[%s210 + $0x228] sm:$0xff] %v784
      %861 = vst [vmem:[%s210 + $0x230] sm:$0xff] %v787
      %862 = vst [vmem:[%s210 + $0x238] sm:$0xff] %v789
      %v863 = vadd.f32 %v612, %v614
      %v864 = vadd.f32 %v863, %v617
      %v865 = vadd.f32 %v864, %v619
      %v866 = vadd.f32 %v865, %v622
      %v867 = vadd.f32 %v866, %v624
      %v868 = vadd.f32 %v867, %v627
      %v869 = vadd.f32 %v868, %v629
      %v870 = vadd.f32 %v869, %v632
      %v871 = vadd.f32 %v870, %v634
      %v872 = vadd.f32 %v871, %v637
      %v873 = vadd.f32 %v872, %v639
      %v874 = vadd.f32 %v873, %v642
      %v875 = vadd.f32 %v874, %v644
      %v876 = vadd.f32 %v875, %v647
      %v877 = vadd.f32 %v876, %v649
      %v878 = vadd.f32 %v877, %v652
      %v879 = vadd.f32 %v878, %v654
      %v880 = vadd.f32 %v879, %v657
      %v881 = vadd.f32 %v880, %v659
      %v882 = vadd.f32 %v881, %v662
      %v883 = vadd.f32 %v882, %v664
      %v884 = vadd.f32 %v883, %v667
      %v885 = vadd.f32 %v884, %v669
      %v886 = vadd.f32 %v885, %v672
      %v887 = vadd.f32 %v886, %v674
      %v888 = vadd.f32 %v887, %v677
      %v889 = vadd.f32 %v888, %v679
      %v890 = vadd.f32 %v889, %v682
      %v891 = vadd.f32 %v890, %v684
      %v892 = vadd.f32 %v891, %v687
      %v893 = vadd.f32 %v892, %v689
      %v894 = vadd.f32 %v893, %v692
      %v895 = vadd.f32 %v894, %v694
      %v896 = vadd.f32 %v895, %v697
      %v897 = vadd.f32 %v896, %v699
      %v898 = vadd.f32 %v897, %v702
      %v899 = vadd.f32 %v898, %v704
      %v900 = vadd.f32 %v899, %v707
      %v901 = vadd.f32 %v900, %v709
      %v902 = vadd.f32 %v901, %v712
      %v903 = vadd.f32 %v902, %v714
      %v904 = vadd.f32 %v903, %v717
      %v905 = vadd.f32 %v904, %v719
      %v906 = vadd.f32 %v905, %v722
      %v907 = vadd.f32 %v906, %v724
      %v908 = vadd.f32 %v907, %v727
      %v909 = vadd.f32 %v908, %v729
      %v910 = vadd.f32 %v909, %v732
      %v911 = vadd.f32 %v910, %v734
      %v912 = vadd.f32 %v911, %v737
      %v913 = vadd.f32 %v912, %v739
      %v914 = vadd.f32 %v913, %v742
      %v915 = vadd.f32 %v914, %v744
      %v916 = vadd.f32 %v915, %v747
      %v917 = vadd.f32 %v916, %v749
      %v918 = vadd.f32 %v917, %v752
      %v919 = vadd.f32 %v918, %v754
      %v920 = vadd.f32 %v919, %v757
      %v921 = vadd.f32 %v920, %v759
      %v922 = vadd.f32 %v921, %v762
      %v923 = vadd.f32 %v922, %v764
      %v924 = vadd.f32 %v923, %v767
      %v925 = vadd.f32 %v924, %v769
      %v926 = vadd.f32 %v925, %v772
      %v927 = vadd.f32 %v926, %v774
      %v928 = vadd.f32 %v927, %v777
      %v929 = vadd.f32 %v928, %v779
      %v930 = vadd.f32 %v929, %v782
      %v931 = vadd.f32 %v930, %v784
      %v932 = vadd.f32 %v931, %v787
      %v933 = vadd.f32 %v932, %v789
      %v934 = vrot.slane %v933, 4
      %v935 = vadd.f32 %v933, %v934
      %v936 = vrot.slane %v935, 2
      %v937 = vadd.f32 %v935, %v936
      %v938 = vrot.slane %v937, 1
      %v939 = vadd.f32 %v937, %v938
      %940 = vst [vmem:[%s214] sm:$0x1] %v939
      %v941 = vmul.f32 %v612, %v612
      %v942 = vmul.f32 %v614, %v614
      %v943 = vmul.f32 %v617, %v617
      %v944 = vmul.f32 %v619, %v619
      %v945 = vmul.f32 %v622, %v622
      %v946 = vmul.f32 %v624, %v624
      %v947 = vmul.f32 %v627, %v627
      %v948 = vmul.f32 %v629, %v629
      %v949 = vmul.f32 %v632, %v632
      %v950 = vmul.f32 %v634, %v634
      %v951 = vmul.f32 %v637, %v637
      %v952 = vmul.f32 %v639, %v639
      %v953 = vmul.f32 %v642, %v642
      %v954 = vmul.f32 %v644, %v644
      %v955 = vmul.f32 %v647, %v647
      %v956 = vmul.f32 %v649, %v649
      %v957 = vmul.f32 %v652, %v652
      %v958 = vmul.f32 %v654, %v654
      %v959 = vmul.f32 %v657, %v657
      %v960 = vmul.f32 %v659, %v659
      %v961 = vmul.f32 %v662, %v662
      %v962 = vmul.f32 %v664, %v664
      %v963 = vmul.f32 %v667, %v667
      %v964 = vmul.f32 %v669, %v669
      %v965 = vmul.f32 %v672, %v672
      %v966 = vmul.f32 %v674, %v674
      %v967 = vmul.f32 %v677, %v677
      %v968 = vmul.f32 %v679, %v679
      %v969 = vmul.f32 %v682, %v682
      %v970 = vmul.f32 %v684, %v684
      %v971 = vmul.f32 %v687, %v687
      %v972 = vmul.f32 %v689, %v689
      %v973 = vmul.f32 %v692, %v692
      %v974 = vmul.f32 %v694, %v694
      %v975 = vmul.f32 %v697, %v697
      %v976 = vmul.f32 %v699, %v699
      %v977 = vmul.f32 %v702, %v702
      %v978 = vmul.f32 %v704, %v704
      %v979 = vmul.f32 %v707, %v707
      %v980 = vmul.f32 %v709, %v709
      %v981 = vmul.f32 %v712, %v712
      %v982 = vmul.f32 %v714, %v714
      %v983 = vmul.f32 %v717, %v717
      %v984 = vmul.f32 %v719, %v719
      %v985 = vmul.f32 %v722, %v722
      %v986 = vmul.f32 %v724, %v724
      %v987 = vmul.f32 %v727, %v727
      %v988 = vmul.f32 %v729, %v729
      %v989 = vmul.f32 %v732, %v732
      %v990 = vmul.f32 %v734, %v734
      %v991 = vmul.f32 %v737, %v737
      %v992 = vmul.f32 %v739, %v739
      %v993 = vmul.f32 %v742, %v742
      %v994 = vmul.f32 %v744, %v744
      %v995 = vmul.f32 %v747, %v747
      %v996 = vmul.f32 %v749, %v749
      %v997 = vmul.f32 %v752, %v752
      %v998 = vmul.f32 %v754, %v754
      %v999 = vmul.f32 %v757, %v757
      %v1000 = vmul.f32 %v759, %v759
      %v1001 = vmul.f32 %v762, %v762
      %v1002 = vmul.f32 %v764, %v764
      %v1003 = vmul.f32 %v767, %v767
      %v1004 = vmul.f32 %v769, %v769
      %v1005 = vmul.f32 %v772, %v772
      %v1006 = vmul.f32 %v774, %v774
      %v1007 = vmul.f32 %v777, %v777
      %v1008 = vmul.f32 %v779, %v779
      %v1009 = vmul.f32 %v782, %v782
      %v1010 = vmul.f32 %v784, %v784
      %v1011 = vmul.f32 %v787, %v787
      %v1012 = vmul.f32 %v789, %v789
      %v1013 = vadd.f32 %v941, %v942
      %v1014 = vadd.f32 %v1013, %v943
      %v1015 = vadd.f32 %v1014, %v944
      %v1016 = vadd.f32 %v1015, %v945
      %v1017 = vadd.f32 %v1016, %v946
      %v1018 = vadd.f32 %v1017, %v947
      %v1019 = vadd.f32 %v1018, %v948
      %v1020 = vadd.f32 %v1019, %v949
      %v1021 = vadd.f32 %v1020, %v950
      %v1022 = vadd.f32 %v1021, %v951
      %v1023 = vadd.f32 %v1022, %v952
      %v1024 = vadd.f32 %v1023, %v953
      %v1025 = vadd.f32 %v1024, %v954
      %v1026 = vadd.f32 %v1025, %v955
      %v1027 = vadd.f32 %v1026, %v956
      %v1028 = vadd.f32 %v1027, %v957
      %v1029 = vadd.f32 %v1028, %v958
      %v1030 = vadd.f32 %v1029, %v959
      %v1031 = vadd.f32 %v1030, %v960
      %v1032 = vadd.f32 %v1031, %v961
      %v1033 = vadd.f32 %v1032, %v962
      %v1034 = vadd.f32 %v1033, %v963
      %v1035 = vadd.f32 %v1034, %v964
      %v1036 = vadd.f32 %v1035, %v965
      %v1037 = vadd.f32 %v1036, %v966
      %v1038 = vadd.f32 %v1037, %v967
      %v1039 = vadd.f32 %v1038, %v968
      %v1040 = vadd.f32 %v1039, %v969
      %v1041 = vadd.f32 %v1040, %v970
      %v1042 = vadd.f32 %v1041, %v971
      %v1043 = vadd.f32 %v1042, %v972
      %v1044 = vadd.f32 %v1043, %v973
      %v1045 = vadd.f32 %v1044, %v974
      %v1046 = vadd.f32 %v1045, %v975
      %v1047 = vadd.f32 %v1046, %v976
      %v1048 = vadd.f32 %v1047, %v977
      %v1049 = vadd.f32 %v1048, %v978
      %v1050 = vadd.f32 %v1049, %v979
      %v1051 = vadd.f32 %v1050, %v980
      %v1052 = vadd.f32 %v1051, %v981
      %v1053 = vadd.f32 %v1052, %v982
      %v1054 = vadd.f32 %v1053, %v983
      %v1055 = vadd.f32 %v1054, %v984
      %v1056 = vadd.f32 %v1055, %v985
      %v1057 = vadd.f32 %v1056, %v986
      %v1058 = vadd.f32 %v1057, %v987
      %v1059 = vadd.f32 %v1058, %v988
      %v1060 = vadd.f32 %v1059, %v989
      %v1061 = vadd.f32 %v1060, %v990
      %v1062 = vadd.f32 %v1061, %v991
      %v1063 = vadd.f32 %v1062, %v992
      %v1064 = vadd.f32 %v1063, %v993
      %v1065 = vadd.f32 %v1064, %v994
      %v1066 = vadd.f32 %v1065, %v995
      %v1067 = vadd.f32 %v1066, %v996
      %v1068 = vadd.f32 %v1067, %v997
      %v1069 = vadd.f32 %v1068, %v998
      %v1070 = vadd.f32 %v1069, %v999
      %v1071 = vadd.f32 %v1070, %v1000
      %v1072 = vadd.f32 %v1071, %v1001
      %v1073 = vadd.f32 %v1072, %v1002
      %v1074 = vadd.f32 %v1073, %v1003
      %v1075 = vadd.f32 %v1074, %v1004
      %v1076 = vadd.f32 %v1075, %v1005
      %v1077 = vadd.f32 %v1076, %v1006
      %v1078 = vadd.f32 %v1077, %v1007
      %v1079 = vadd.f32 %v1078, %v1008
      %v1080 = vadd.f32 %v1079, %v1009
      %v1081 = vadd.f32 %v1080, %v1010
      %v1082 = vadd.f32 %v1081, %v1011
      %v1083 = vadd.f32 %v1082, %v1012
      %v1084 = vrot.slane %v1083, 4
      %v1085 = vadd.f32 %v1083, %v1084
      %v1086 = vrot.slane %v1085, 2
      %v1087 = vadd.f32 %v1085, %v1086
      %v1088 = vrot.slane %v1087, 1
      %v1089 = vadd.f32 %v1087, %v1088
      %1090 = vst [vmem:[%s217] sm:$0x1] %v1089
      %s1091 = smul.u32 72, %s16
      %p1092 = scmp.lt.s32.totalorder %s1091, 143
      %s1093 = scalar_select %p1092, %s1091, 143
      %s1094 = smul.addr %s1093, 8
      %s1095 = scalar_lea.vmem %s2, %s1094
      %p1096 = scmp.lt.s32.totalorder %s16, 1
      %s1097 = scalar_select %p1096, %s16, 1
      %s1098 = scalar_lea.vmem %s3, %s1097
      %p1099 = scmp.lt.s32.totalorder %s16, 1
      %s1100 = scalar_select %p1099, %s16, 1
      %s1101 = scalar_lea.vmem %s4, %s1100
      // Predicated region
      $region29: #{extractor_gray_forward.4} parent=27 // pred_check
        %p1102 = pneg %p81
      $region30: #{extractor_gray_forward.4} parent=27 // pred_check_branch
        %1104 = sbr.rel (%p1102) target = $region32
      $region31: #{extractor_gray_forward.4} parent=27 // pred_region
        %s1105 = smul.u32 72, %s16
      $region32: #{extractor_gray_forward.4} parent=27 // pred_fallthru
        _
      // Predicated region
      $region33: #{extractor_gray_forward.4} parent=27 // pred_check
        %p1106 = pneg %p107
      $region34: #{extractor_gray_forward.4} parent=27 // pred_check_branch
        %1108 = sbr.rel (%p1106) target = $region36
      $region35: #{extractor_gray_forward.4} parent=27 // pred_region
        _
      $region36: #{extractor_gray_forward.4} parent=27 // pred_fallthru
        _
      // Predicated region
      $region37: #{extractor_gray_forward.4} parent=27 // pred_check
        %p1109 = pneg %p133
      $region38: #{extractor_gray_forward.4} parent=27 // pred_check_branch
        %1111 = sbr.rel (%p1109) target = $region40
      $region39: #{extractor_gray_forward.4} parent=27 // pred_region
        _
      $region40: #{extractor_gray_forward.4} parent=27 // pred_fallthru
        _
    $region28: #{extractor_gray_forward.4} parent=5 // pred_fallthru
      _
    %p1112 = scmp.le.s32.totalorder 2, %s11
    // Predicated region
    $region41: #{extractor_gray_forward.4} parent=5 // pred_check
      %p1113 = pneg %p1112
    $region42: #{extractor_gray_forward.4} parent=5 // pred_check_branch
      %1115 = sbr.rel (%p1113) target = $region44
    $region43: #{extractor_gray_forward.4} parent=5 // pred_region
      %s1116 = ssub.s32 %s11, 2
      // Predicated region
      $region45: #{extractor_gray_forward.4} parent=43 // pred_check
        %p1117 = pneg %p87
      $region46: #{extractor_gray_forward.4} parent=43 // pred_check_branch
        %1119 = sbr.rel (%p1117) target = $region48
      $region47: #{extractor_gray_forward.4} parent=43 // pred_region
        %s1120 = smul.u32 72, %s17
        %p1121 = scmp.lt.s32.totalorder %s1120, 143
        %s1122 = scalar_select %p1121, %s1120, 143
        %s1123 = smul.addr %s1122, 8
        %s1124 = scalar_lea.vmem %s2, %s1123
      $region48: #{extractor_gray_forward.4} parent=43 // pred_fallthru
        _
      // Predicated region
      $region49: #{extractor_gray_forward.4} parent=43 // pred_check
        %p1125 = pneg %p113
      $region50: #{extractor_gray_forward.4} parent=43 // pred_check_branch
        %1127 = sbr.rel (%p1125) target = $region52
      $region51: #{extractor_gray_forward.4} parent=43 // pred_region
        %p1128 = scmp.lt.s32.totalorder %s17, 1
        %s1129 = scalar_select %p1128, %s17, 1
        %s1130 = scalar_lea.vmem %s3, %s1129
      $region52: #{extractor_gray_forward.4} parent=43 // pred_fallthru
        _
      // Predicated region
      $region53: #{extractor_gray_forward.4} parent=43 // pred_check
        %p1131 = pneg %p139
      $region54: #{extractor_gray_forward.4} parent=43 // pred_check_branch
        %1133 = sbr.rel (%p1131) target = $region56
      $region55: #{extractor_gray_forward.4} parent=43 // pred_region
        %p1134 = scmp.lt.s32.totalorder %s17, 1
        %s1135 = scalar_select %p1134, %s17, 1
        %s1136 = scalar_lea.vmem %s4, %s1135
      $region56: #{extractor_gray_forward.4} parent=43 // pred_fallthru
        _
    $region44: #{extractor_gray_forward.4} parent=5 // pred_fallthru
      _
  $region6: #{extractor_gray_forward.4} parent=0 // loop_footer
    %s15 = sadd.s32 1, %s11
  $region7: #{extractor_gray_forward.4} parent=0 // loop_footer_branch
    %10 = sbr.rel target = $region3
  $region8: #{extractor_gray_forward.4} parent=0 // loop_exit
    _

// kernel: extractor_gray_forward.5
$region0: #{extractor_gray_forward.5}
  #allocation0 [shape = 'u32[]', space=smem, size = 0x4, offset = 0x4, fixed_abs, tag = 'smem constant byte address 0x4 - core index']
  #allocation1 [shape = 'u32[72,128]{1,0:T(1,128)}', space=vmem, size = 0x9000, scoped, tag = 'internal scratch']
  %s0 = inlined_call_operand.vmem [shape: f32[288,512], index: 0, kind: input, shape index: {}]
  %s1 = inlined_call_operand.vmem [shape: f32[1,512], index: 1, kind: input, shape index: {}]
  %s2 = inlined_call_operand.vmem [shape: f32[1,512], index: 2, kind: input, shape index: {}]
  %s3 = inlined_call_operand.vmem [shape: f32[288,128], index: 3, kind: output, shape index: {}]
  %s4 = sld [smem:[#allocation0]]
  $region22: #{extractor_gray_forward.5} parent=0
    _
  %s6 = ssub.s32 1, %s4
  %s7 = scalar_select 0, %s6, %s4
  // Predicated region
  $region2: #{extractor_gray_forward.5} parent=0 // pred_check
    _
  $region3: #{extractor_gray_forward.5} parent=0 // pred_check_branch
    %9 = sbr.rel (0) target = $region5
  $region4: #{extractor_gray_forward.5} parent=0 // pred_region
    _
  $region5: #{extractor_gray_forward.5} parent=0 // pred_fallthru
    _
  // Predicated region
  $region6: #{extractor_gray_forward.5} parent=0 // pred_check
    _
  $region7: #{extractor_gray_forward.5} parent=0 // pred_check_branch
    %11 = sbr.rel (0) target = $region9
  $region8: #{extractor_gray_forward.5} parent=0 // pred_region
    _
  $region9: #{extractor_gray_forward.5} parent=0 // pred_fallthru
    _
  // Predicated region
  $region10: #{extractor_gray_forward.5} parent=0 // pred_check
    _
  $region11: #{extractor_gray_forward.5} parent=0 // pred_check_branch
    %13 = sbr.rel (0) target = $region13
  $region12: #{extractor_gray_forward.5} parent=0 // pred_region
    _
  $region13: #{extractor_gray_forward.5} parent=0 // pred_fallthru
    _
  %v14 = vld [vmem:[%s0] sm:$0xff]
  %v15 = vld [vmem:[%s0 + $0x8] sm:$0xff]
  %v16 = vld [vmem:[%s0 + $0x10] sm:$0xff]
  %v17 = vld [vmem:[%s0 + $0x18] sm:$0xff]
  %v18 = vld [vmem:[%s0 + $0x20] sm:$0xff]
  %v19 = vld [vmem:[%s0 + $0x28] sm:$0xff]
  %v20 = vld [vmem:[%s0 + $0x30] sm:$0xff]
  %v21 = vld [vmem:[%s0 + $0x38] sm:$0xff]
  %v22 = vld [vmem:[%s0 + $0x40] sm:$0xff]
  %v23 = vld [vmem:[%s0 + $0x48] sm:$0xff]
  %v24 = vld [vmem:[%s0 + $0x50] sm:$0xff]
  %v25 = vld [vmem:[%s0 + $0x58] sm:$0xff]
  %v26 = vld [vmem:[%s0 + $0x60] sm:$0xff]
  %v27 = vld [vmem:[%s0 + $0x68] sm:$0xff]
  %v28 = vld [vmem:[%s0 + $0x70] sm:$0xff]
  %v29 = vld [vmem:[%s0 + $0x78] sm:$0xff]
  %v30 = vld [vmem:[%s0 + $0x80] sm:$0xff]
  %v31 = vld [vmem:[%s0 + $0x88] sm:$0xff]
  %v32 = vld [vmem:[%s0 + $0x90] sm:$0xff]
  %v33 = vld [vmem:[%s0 + $0x98] sm:$0xff]
  %v34 = vld [vmem:[%s0 + $0xa0] sm:$0xff]
  %v35 = vld [vmem:[%s0 + $0xa8] sm:$0xff]
  %v36 = vld [vmem:[%s0 + $0xb0] sm:$0xff]
  %v37 = vld [vmem:[%s0 + $0xb8] sm:$0xff]
  %v38 = vld [vmem:[%s0 + $0xc0] sm:$0xff]
  %v39 = vld [vmem:[%s0 + $0xc8] sm:$0xff]
  %v40 = vld [vmem:[%s0 + $0xd0] sm:$0xff]
  %v41 = vld [vmem:[%s0 + $0xd8] sm:$0xff]
  %v42 = vld [vmem:[%s0 + $0xe0] sm:$0xff]
  %v43 = vld [vmem:[%s0 + $0xe8] sm:$0xff]
  %v44 = vld [vmem:[%s0 + $0xf0] sm:$0xff]
  %v45 = vld [vmem:[%s0 + $0xf8] sm:$0xff]
  %v46 = vld [vmem:[%s0 + $0x100] sm:$0xff]
  %v47 = vld [vmem:[%s0 + $0x108] sm:$0xff]
  %v48 = vld [vmem:[%s0 + $0x110] sm:$0xff]
  %v49 = vld [vmem:[%s0 + $0x118] sm:$0xff]
  %v50 = vld [vmem:[%s0 + $0x120] sm:$0xff]
  %v51 = vld [vmem:[%s0 + $0x128] sm:$0xff]
  %v52 = vld [vmem:[%s0 + $0x130] sm:$0xff]
  %v53 = vld [vmem:[%s0 + $0x138] sm:$0xff]
  %v54 = vld [vmem:[%s0 + $0x140] sm:$0xff]
  %v55 = vld [vmem:[%s0 + $0x148] sm:$0xff]
  %v56 = vld [vmem:[%s0 + $0x150] sm:$0xff]
  %v57 = vld [vmem:[%s0 + $0x158] sm:$0xff]
  %v58 = vld [vmem:[%s0 + $0x160] sm:$0xff]
  %v59 = vld [vmem:[%s0 + $0x168] sm:$0xff]
  %v60 = vld [vmem:[%s0 + $0x170] sm:$0xff]
  %v61 = vld [vmem:[%s0 + $0x178] sm:$0xff]
  %v62 = vld [vmem:[%s0 + $0x180] sm:$0xff]
  %v63 = vld [vmem:[%s0 + $0x188] sm:$0xff]
  %v64 = vld [vmem:[%s0 + $0x190] sm:$0xff]
  %v65 = vld [vmem:[%s0 + $0x198] sm:$0xff]
  %v66 = vld [vmem:[%s0 + $0x1a0] sm:$0xff]
  %v67 = vld [vmem:[%s0 + $0x1a8] sm:$0xff]
  %v68 = vld [vmem:[%s0 + $0x1b0] sm:$0xff]
  %v69 = vld [vmem:[%s0 + $0x1b8] sm:$0xff]
  %v70 = vld [vmem:[%s0 + $0x1c0] sm:$0xff]
  %v71 = vld [vmem:[%s0 + $0x1c8] sm:$0xff]
  %v72 = vld [vmem:[%s0 + $0x1d0] sm:$0xff]
  %v73 = vld [vmem:[%s0 + $0x1d8] sm:$0xff]
  %v74 = vld [vmem:[%s0 + $0x1e0] sm:$0xff]
  %v75 = vld [vmem:[%s0 + $0x1e8] sm:$0xff]
  %v76 = vld [vmem:[%s0 + $0x1f0] sm:$0xff]
  %v77 = vld [vmem:[%s0 + $0x1f8] sm:$0xff]
  %v78 = vld [vmem:[%s0 + $0x200] sm:$0xff]
  %v79 = vld [vmem:[%s0 + $0x208] sm:$0xff]
  %v80 = vld [vmem:[%s0 + $0x210] sm:$0xff]
  %v81 = vld [vmem:[%s0 + $0x218] sm:$0xff]
  %v82 = vld [vmem:[%s0 + $0x220] sm:$0xff]
  %v83 = vld [vmem:[%s0 + $0x228] sm:$0xff]
  %v84 = vld [vmem:[%s0 + $0x230] sm:$0xff]
  %v85 = vld [vmem:[%s0 + $0x238] sm:$0xff]
  %v86 = vld [vmem:[%s0 + $0x240] sm:$0xff]
  %v87 = vld [vmem:[%s0 + $0x248] sm:$0xff]
  %v88 = vld [vmem:[%s0 + $0x250] sm:$0xff]
  %v89 = vld [vmem:[%s0 + $0x258] sm:$0xff]
  %v90 = vld [vmem:[%s0 + $0x260] sm:$0xff]
  %v91 = vld [vmem:[%s0 + $0x268] sm:$0xff]
  %v92 = vld [vmem:[%s0 + $0x270] sm:$0xff]
  %v93 = vld [vmem:[%s0 + $0x278] sm:$0xff]
  %v94 = vld [vmem:[%s0 + $0x280] sm:$0xff]
  %v95 = vld [vmem:[%s0 + $0x288] sm:$0xff]
  %v96 = vld [vmem:[%s0 + $0x290] sm:$0xff]
  %v97 = vld [vmem:[%s0 + $0x298] sm:$0xff]
  %v98 = vld [vmem:[%s0 + $0x2a0] sm:$0xff]
  %v99 = vld [vmem:[%s0 + $0x2a8] sm:$0xff]
  %v100 = vld [vmem:[%s0 + $0x2b0] sm:$0xff]
  %v101 = vld [vmem:[%s0 + $0x2b8] sm:$0xff]
  %v102 = vld [vmem:[%s0 + $0x2c0] sm:$0xff]
  %v103 = vld [vmem:[%s0 + $0x2c8] sm:$0xff]
  %v104 = vld [vmem:[%s0 + $0x2d0] sm:$0xff]
  %v105 = vld [vmem:[%s0 + $0x2d8] sm:$0xff]
  %v106 = vld [vmem:[%s0 + $0x2e0] sm:$0xff]
  %v107 = vld [vmem:[%s0 + $0x2e8] sm:$0xff]
  %v108 = vld [vmem:[%s0 + $0x2f0] sm:$0xff]
  %v109 = vld [vmem:[%s0 + $0x2f8] sm:$0xff]
  %v110 = vld [vmem:[%s0 + $0x300] sm:$0xff]
  %v111 = vld [vmem:[%s0 + $0x308] sm:$0xff]
  %v112 = vld [vmem:[%s0 + $0x310] sm:$0xff]
  %v113 = vld [vmem:[%s0 + $0x318] sm:$0xff]
  %v114 = vld [vmem:[%s0 + $0x320] sm:$0xff]
  %v115 = vld [vmem:[%s0 + $0x328] sm:$0xff]
  %v116 = vld [vmem:[%s0 + $0x330] sm:$0xff]
  %v117 = vld [vmem:[%s0 + $0x338] sm:$0xff]
  %v118 = vld [vmem:[%s0 + $0x340] sm:$0xff]
  %v119 = vld [vmem:[%s0 + $0x348] sm:$0xff]
  %v120 = vld [vmem:[%s0 + $0x350] sm:$0xff]
  %v121 = vld [vmem:[%s0 + $0x358] sm:$0xff]
  %v122 = vld [vmem:[%s0 + $0x360] sm:$0xff]
  %v123 = vld [vmem:[%s0 + $0x368] sm:$0xff]
  %v124 = vld [vmem:[%s0 + $0x370] sm:$0xff]
  %v125 = vld [vmem:[%s0 + $0x378] sm:$0xff]
  %v126 = vld [vmem:[%s0 + $0x380] sm:$0xff]
  %v127 = vld [vmem:[%s0 + $0x388] sm:$0xff]
  %v128 = vld [vmem:[%s0 + $0x390] sm:$0xff]
  %v129 = vld [vmem:[%s0 + $0x398] sm:$0xff]
  %v130 = vld [vmem:[%s0 + $0x3a0] sm:$0xff]
  %v131 = vld [vmem:[%s0 + $0x3a8] sm:$0xff]
  %v132 = vld [vmem:[%s0 + $0x3b0] sm:$0xff]
  %v133 = vld [vmem:[%s0 + $0x3b8] sm:$0xff]
  %v134 = vld [vmem:[%s0 + $0x3c0] sm:$0xff]
  %v135 = vld [vmem:[%s0 + $0x3c8] sm:$0xff]
  %v136 = vld [vmem:[%s0 + $0x3d0] sm:$0xff]
  %v137 = vld [vmem:[%s0 + $0x3d8] sm:$0xff]
  %v138 = vld [vmem:[%s0 + $0x3e0] sm:$0xff]
  %v139 = vld [vmem:[%s0 + $0x3e8] sm:$0xff]
  %v140 = vld [vmem:[%s0 + $0x3f0] sm:$0xff]
  %v141 = vld [vmem:[%s0 + $0x3f8] sm:$0xff]
  %v142 = vld [vmem:[%s0 + $0x400] sm:$0xff]
  %v143 = vld [vmem:[%s0 + $0x408] sm:$0xff]
  %v144 = vld [vmem:[%s0 + $0x410] sm:$0xff]
  %v145 = vld [vmem:[%s0 + $0x418] sm:$0xff]
  %v146 = vld [vmem:[%s0 + $0x420] sm:$0xff]
  %v147 = vld [vmem:[%s0 + $0x428] sm:$0xff]
  %v148 = vld [vmem:[%s0 + $0x430] sm:$0xff]
  %v149 = vld [vmem:[%s0 + $0x438] sm:$0xff]
  %v150 = vld [vmem:[%s0 + $0x440] sm:$0xff]
  %v151 = vld [vmem:[%s0 + $0x448] sm:$0xff]
  %v152 = vld [vmem:[%s0 + $0x450] sm:$0xff]
  %v153 = vld [vmem:[%s0 + $0x458] sm:$0xff]
  %v154 = vld [vmem:[%s0 + $0x460] sm:$0xff]
  %v155 = vld [vmem:[%s0 + $0x468] sm:$0xff]
  %v156 = vld [vmem:[%s0 + $0x470] sm:$0xff]
  %v157 = vld [vmem:[%s0 + $0x478] sm:$0xff]
  %v158 = vld [vmem:[%s1] sm:$0xf]
  %v160 = vperm.slane %v158, 0
  %v161 = vperm.slane %v158, 1
  %v162 = vperm.slane %v158, 2
  %v163 = vperm.slane %v158, 3
  %v168 = vmul.f32 %v14, %v160
  %v169 = vmul.f32 %v15, %v161
  %v170 = vmul.f32 %v16, %v162
  %v171 = vmul.f32 %v17, %v163
  %v172 = vmul.f32 %v18, %v160
  %v173 = vmul.f32 %v19, %v161
  %v174 = vmul.f32 %v20, %v162
  %v175 = vmul.f32 %v21, %v163
  %v176 = vmul.f32 %v22, %v160
  %v177 = vmul.f32 %v23, %v161
  %v178 = vmul.f32 %v24, %v162
  %v179 = vmul.f32 %v25, %v163
  %v180 = vmul.f32 %v26, %v160
  %v181 = vmul.f32 %v27, %v161
  %v182 = vmul.f32 %v28, %v162
  %v183 = vmul.f32 %v29, %v163
  %v184 = vmul.f32 %v30, %v160
  %v185 = vmul.f32 %v31, %v161
  %v186 = vmul.f32 %v32, %v162
  %v187 = vmul.f32 %v33, %v163
  %v188 = vmul.f32 %v34, %v160
  %v189 = vmul.f32 %v35, %v161
  %v190 = vmul.f32 %v36, %v162
  %v191 = vmul.f32 %v37, %v163
  %v192 = vmul.f32 %v38, %v160
  %v193 = vmul.f32 %v39, %v161
  %v194 = vmul.f32 %v40, %v162
  %v195 = vmul.f32 %v41, %v163
  %v196 = vmul.f32 %v42, %v160
  %v197 = vmul.f32 %v43, %v161
  %v198 = vmul.f32 %v44, %v162
  %v199 = vmul.f32 %v45, %v163
  %v200 = vmul.f32 %v46, %v160
  %v201 = vmul.f32 %v47, %v161
  %v202 = vmul.f32 %v48, %v162
  %v203 = vmul.f32 %v49, %v163
  %v204 = vmul.f32 %v50, %v160
  %v205 = vmul.f32 %v51, %v161
  %v206 = vmul.f32 %v52, %v162
  %v207 = vmul.f32 %v53, %v163
  %v208 = vmul.f32 %v54, %v160
  %v209 = vmul.f32 %v55, %v161
  %v210 = vmul.f32 %v56, %v162
  %v211 = vmul.f32 %v57, %v163
  %v212 = vmul.f32 %v58, %v160
  %v213 = vmul.f32 %v59, %v161
  %v214 = vmul.f32 %v60, %v162
  %v215 = vmul.f32 %v61, %v163
  %v216 = vmul.f32 %v62, %v160
  %v217 = vmul.f32 %v63, %v161
  %v218 = vmul.f32 %v64, %v162
  %v219 = vmul.f32 %v65, %v163
  %v220 = vmul.f32 %v66, %v160
  %v221 = vmul.f32 %v67, %v161
  %v222 = vmul.f32 %v68, %v162
  %v223 = vmul.f32 %v69, %v163
  %v224 = vmul.f32 %v70, %v160
  %v225 = vmul.f32 %v71, %v161
  %v226 = vmul.f32 %v72, %v162
  %v227 = vmul.f32 %v73, %v163
  %v228 = vmul.f32 %v74, %v160
  %v229 = vmul.f32 %v75, %v161
  %v230 = vmul.f32 %v76, %v162
  %v231 = vmul.f32 %v77, %v163
  %v232 = vmul.f32 %v78, %v160
  %v233 = vmul.f32 %v79, %v161
  %v234 = vmul.f32 %v80, %v162
  %v235 = vmul.f32 %v81, %v163
  %v236 = vmul.f32 %v82, %v160
  %v237 = vmul.f32 %v83, %v161
  %v238 = vmul.f32 %v84, %v162
  %v239 = vmul.f32 %v85, %v163
  %v240 = vmul.f32 %v86, %v160
  %v241 = vmul.f32 %v87, %v161
  %v242 = vmul.f32 %v88, %v162
  %v243 = vmul.f32 %v89, %v163
  %v244 = vmul.f32 %v90, %v160
  %v245 = vmul.f32 %v91, %v161
  %v246 = vmul.f32 %v92, %v162
  %v247 = vmul.f32 %v93, %v163
  %v248 = vmul.f32 %v94, %v160
  %v249 = vmul.f32 %v95, %v161
  %v250 = vmul.f32 %v96, %v162
  %v251 = vmul.f32 %v97, %v163
  %v252 = vmul.f32 %v98, %v160
  %v253 = vmul.f32 %v99, %v161
  %v254 = vmul.f32 %v100, %v162
  %v255 = vmul.f32 %v101, %v163
  %v256 = vmul.f32 %v102, %v160
  %v257 = vmul.f32 %v103, %v161
  %v258 = vmul.f32 %v104, %v162
  %v259 = vmul.f32 %v105, %v163
  %v260 = vmul.f32 %v106, %v160
  %v261 = vmul.f32 %v107, %v161
  %v262 = vmul.f32 %v108, %v162
  %v263 = vmul.f32 %v109, %v163
  %v264 = vmul.f32 %v110, %v160
  %v265 = vmul.f32 %v111, %v161
  %v266 = vmul.f32 %v112, %v162
  %v267 = vmul.f32 %v113, %v163
  %v268 = vmul.f32 %v114, %v160
  %v269 = vmul.f32 %v115, %v161
  %v270 = vmul.f32 %v116, %v162
  %v271 = vmul.f32 %v117, %v163
  %v272 = vmul.f32 %v118, %v160
  %v273 = vmul.f32 %v119, %v161
  %v274 = vmul.f32 %v120, %v162
  %v275 = vmul.f32 %v121, %v163
  %v276 = vmul.f32 %v122, %v160
  %v277 = vmul.f32 %v123, %v161
  %v278 = vmul.f32 %v124, %v162
  %v279 = vmul.f32 %v125, %v163
  %v280 = vmul.f32 %v126, %v160
  %v281 = vmul.f32 %v127, %v161
  %v282 = vmul.f32 %v128, %v162
  %v283 = vmul.f32 %v129, %v163
  %v284 = vmul.f32 %v130, %v160
  %v285 = vmul.f32 %v131, %v161
  %v286 = vmul.f32 %v132, %v162
  %v287 = vmul.f32 %v133, %v163
  %v288 = vmul.f32 %v134, %v160
  %v289 = vmul.f32 %v135, %v161
  %v290 = vmul.f32 %v136, %v162
  %v291 = vmul.f32 %v137, %v163
  %v292 = vmul.f32 %v138, %v160
  %v293 = vmul.f32 %v139, %v161
  %v294 = vmul.f32 %v140, %v162
  %v295 = vmul.f32 %v141, %v163
  %v296 = vmul.f32 %v142, %v160
  %v297 = vmul.f32 %v143, %v161
  %v298 = vmul.f32 %v144, %v162
  %v299 = vmul.f32 %v145, %v163
  %v300 = vmul.f32 %v146, %v160
  %v301 = vmul.f32 %v147, %v161
  %v302 = vmul.f32 %v148, %v162
  %v303 = vmul.f32 %v149, %v163
  %v304 = vmul.f32 %v150, %v160
  %v305 = vmul.f32 %v151, %v161
  %v306 = vmul.f32 %v152, %v162
  %v307 = vmul.f32 %v153, %v163
  %v308 = vmul.f32 %v154, %v160
  %v309 = vmul.f32 %v155, %v161
  %v310 = vmul.f32 %v156, %v162
  %v311 = vmul.f32 %v157, %v163
  %v312 = vld [vmem:[%s2] sm:$0xf]
  %v314 = vperm.slane %v312, 0
  %v315 = vperm.slane %v312, 1
  %v316 = vperm.slane %v312, 2
  %v317 = vperm.slane %v312, 3
  %v322 = vadd.f32 %v168, %v314
  %v323 = vadd.f32 %v169, %v315
  %v324 = vadd.f32 %v170, %v316
  %v325 = vadd.f32 %v171, %v317
  %v326 = vadd.f32 %v172, %v314
  %v327 = vadd.f32 %v173, %v315
  %v328 = vadd.f32 %v174, %v316
  %v329 = vadd.f32 %v175, %v317
  %v330 = vadd.f32 %v176, %v314
  %v331 = vadd.f32 %v177, %v315
  %v332 = vadd.f32 %v178, %v316
  %v333 = vadd.f32 %v179, %v317
  %v334 = vadd.f32 %v180, %v314
  %v335 = vadd.f32 %v181, %v315
  %v336 = vadd.f32 %v182, %v316
  %v337 = vadd.f32 %v183, %v317
  %v338 = vadd.f32 %v184, %v314
  %v339 = vadd.f32 %v185, %v315
  %v340 = vadd.f32 %v186, %v316
  %v341 = vadd.f32 %v187, %v317
  %v342 = vadd.f32 %v188, %v314
  %v343 = vadd.f32 %v189, %v315
  %v344 = vadd.f32 %v190, %v316
  %v345 = vadd.f32 %v191, %v317
  %v346 = vadd.f32 %v192, %v314
  %v347 = vadd.f32 %v193, %v315
  %v348 = vadd.f32 %v194, %v316
  %v349 = vadd.f32 %v195, %v317
  %v350 = vadd.f32 %v196, %v314
  %v351 = vadd.f32 %v197, %v315
  %v352 = vadd.f32 %v198, %v316
  %v353 = vadd.f32 %v199, %v317
  %v354 = vadd.f32 %v200, %v314
  %v355 = vadd.f32 %v201, %v315
  %v356 = vadd.f32 %v202, %v316
  %v357 = vadd.f32 %v203, %v317
  %v358 = vadd.f32 %v204, %v314
  %v359 = vadd.f32 %v205, %v315
  %v360 = vadd.f32 %v206, %v316
  %v361 = vadd.f32 %v207, %v317
  %v362 = vadd.f32 %v208, %v314
  %v363 = vadd.f32 %v209, %v315
  %v364 = vadd.f32 %v210, %v316
  %v365 = vadd.f32 %v211, %v317
  %v366 = vadd.f32 %v212, %v314
  %v367 = vadd.f32 %v213, %v315
  %v368 = vadd.f32 %v214, %v316
  %v369 = vadd.f32 %v215, %v317
  %v370 = vadd.f32 %v216, %v314
  %v371 = vadd.f32 %v217, %v315
  %v372 = vadd.f32 %v218, %v316
  %v373 = vadd.f32 %v219, %v317
  %v374 = vadd.f32 %v220, %v314
  %v375 = vadd.f32 %v221, %v315
  %v376 = vadd.f32 %v222, %v316
  %v377 = vadd.f32 %v223, %v317
  %v378 = vadd.f32 %v224, %v314
  %v379 = vadd.f32 %v225, %v315
  %v380 = vadd.f32 %v226, %v316
  %v381 = vadd.f32 %v227, %v317
  %v382 = vadd.f32 %v228, %v314
  %v383 = vadd.f32 %v229, %v315
  %v384 = vadd.f32 %v230, %v316
  %v385 = vadd.f32 %v231, %v317
  %v386 = vadd.f32 %v232, %v314
  %v387 = vadd.f32 %v233, %v315
  %v388 = vadd.f32 %v234, %v316
  %v389 = vadd.f32 %v235, %v317
  %v390 = vadd.f32 %v236, %v314
  %v391 = vadd.f32 %v237, %v315
  %v392 = vadd.f32 %v238, %v316
  %v393 = vadd.f32 %v239, %v317
  %v394 = vadd.f32 %v240, %v314
  %v395 = vadd.f32 %v241, %v315
  %v396 = vadd.f32 %v242, %v316
  %v397 = vadd.f32 %v243, %v317
  %v398 = vadd.f32 %v244, %v314
  %v399 = vadd.f32 %v245, %v315
  %v400 = vadd.f32 %v246, %v316
  %v401 = vadd.f32 %v247, %v317
  %v402 = vadd.f32 %v248, %v314
  %v403 = vadd.f32 %v249, %v315
  %v404 = vadd.f32 %v250, %v316
  %v405 = vadd.f32 %v251, %v317
  %v406 = vadd.f32 %v252, %v314
  %v407 = vadd.f32 %v253, %v315
  %v408 = vadd.f32 %v254, %v316
  %v409 = vadd.f32 %v255, %v317
  %v410 = vadd.f32 %v256, %v314
  %v411 = vadd.f32 %v257, %v315
  %v412 = vadd.f32 %v258, %v316
  %v413 = vadd.f32 %v259, %v317
  %v414 = vadd.f32 %v260, %v314
  %v415 = vadd.f32 %v261, %v315
  %v416 = vadd.f32 %v262, %v316
  %v417 = vadd.f32 %v263, %v317
  %v418 = vadd.f32 %v264, %v314
  %v419 = vadd.f32 %v265, %v315
  %v420 = vadd.f32 %v266, %v316
  %v421 = vadd.f32 %v267, %v317
  %v422 = vadd.f32 %v268, %v314
  %v423 = vadd.f32 %v269, %v315
  %v424 = vadd.f32 %v270, %v316
  %v425 = vadd.f32 %v271, %v317
  %v426 = vadd.f32 %v272, %v314
  %v427 = vadd.f32 %v273, %v315
  %v428 = vadd.f32 %v274, %v316
  %v429 = vadd.f32 %v275, %v317
  %v430 = vadd.f32 %v276, %v314
  %v431 = vadd.f32 %v277, %v315
  %v432 = vadd.f32 %v278, %v316
  %v433 = vadd.f32 %v279, %v317
  %v434 = vadd.f32 %v280, %v314
  %v435 = vadd.f32 %v281, %v315
  %v436 = vadd.f32 %v282, %v316
  %v437 = vadd.f32 %v283, %v317
  %v438 = vadd.f32 %v284, %v314
  %v439 = vadd.f32 %v285, %v315
  %v440 = vadd.f32 %v286, %v316
  %v441 = vadd.f32 %v287, %v317
  %v442 = vadd.f32 %v288, %v314
  %v443 = vadd.f32 %v289, %v315
  %v444 = vadd.f32 %v290, %v316
  %v445 = vadd.f32 %v291, %v317
  %v446 = vadd.f32 %v292, %v314
  %v447 = vadd.f32 %v293, %v315
  %v448 = vadd.f32 %v294, %v316
  %v449 = vadd.f32 %v295, %v317
  %v450 = vadd.f32 %v296, %v314
  %v451 = vadd.f32 %v297, %v315
  %v452 = vadd.f32 %v298, %v316
  %v453 = vadd.f32 %v299, %v317
  %v454 = vadd.f32 %v300, %v314
  %v455 = vadd.f32 %v301, %v315
  %v456 = vadd.f32 %v302, %v316
  %v457 = vadd.f32 %v303, %v317
  %v458 = vadd.f32 %v304, %v314
  %v459 = vadd.f32 %v305, %v315
  %v460 = vadd.f32 %v306, %v316
  %v461 = vadd.f32 %v307, %v317
  %v462 = vadd.f32 %v308, %v314
  %v463 = vadd.f32 %v309, %v315
  %v464 = vadd.f32 %v310, %v316
  %v465 = vadd.f32 %v311, %v317
  %v466 = vmax.f32 %v322, 0.0
  %v467 = vmax.f32 %v323, 0.0
  %v468 = vmax.f32 %v324, 0.0
  %v469 = vmax.f32 %v325, 0.0
  %v470 = vmax.f32 %v326, 0.0
  %v471 = vmax.f32 %v327, 0.0
  %v472 = vmax.f32 %v328, 0.0
  %v473 = vmax.f32 %v329, 0.0
  %v474 = vmax.f32 %v330, 0.0
  %v475 = vmax.f32 %v331, 0.0
  %v476 = vmax.f32 %v332, 0.0
  %v477 = vmax.f32 %v333, 0.0
  %v478 = vmax.f32 %v334, 0.0
  %v479 = vmax.f32 %v335, 0.0
  %v480 = vmax.f32 %v336, 0.0
  %v481 = vmax.f32 %v337, 0.0
  %v482 = vmax.f32 %v338, 0.0
  %v483 = vmax.f32 %v339, 0.0
  %v484 = vmax.f32 %v340, 0.0
  %v485 = vmax.f32 %v341, 0.0
  %v486 = vmax.f32 %v342, 0.0
  %v487 = vmax.f32 %v343, 0.0
  %v488 = vmax.f32 %v344, 0.0
  %v489 = vmax.f32 %v345, 0.0
  %v490 = vmax.f32 %v346, 0.0
  %v491 = vmax.f32 %v347, 0.0
  %v492 = vmax.f32 %v348, 0.0
  %v493 = vmax.f32 %v349, 0.0
  %v494 = vmax.f32 %v350, 0.0
  %v495 = vmax.f32 %v351, 0.0
  %v496 = vmax.f32 %v352, 0.0
  %v497 = vmax.f32 %v353, 0.0
  %v498 = vmax.f32 %v354, 0.0
  %v499 = vmax.f32 %v355, 0.0
  %v500 = vmax.f32 %v356, 0.0
  %v501 = vmax.f32 %v357, 0.0
  %v502 = vmax.f32 %v358, 0.0
  %v503 = vmax.f32 %v359, 0.0
  %v504 = vmax.f32 %v360, 0.0
  %v505 = vmax.f32 %v361, 0.0
  %v506 = vmax.f32 %v362, 0.0
  %v507 = vmax.f32 %v363, 0.0
  %v508 = vmax.f32 %v364, 0.0
  %v509 = vmax.f32 %v365, 0.0
  %v510 = vmax.f32 %v366, 0.0
  %v511 = vmax.f32 %v367, 0.0
  %v512 = vmax.f32 %v368, 0.0
  %v513 = vmax.f32 %v369, 0.0
  %v514 = vmax.f32 %v370, 0.0
  %v515 = vmax.f32 %v371, 0.0
  %v516 = vmax.f32 %v372, 0.0
  %v517 = vmax.f32 %v373, 0.0
  %v518 = vmax.f32 %v374, 0.0
  %v519 = vmax.f32 %v375, 0.0
  %v520 = vmax.f32 %v376, 0.0
  %v521 = vmax.f32 %v377, 0.0
  %v522 = vmax.f32 %v378, 0.0
  %v523 = vmax.f32 %v379, 0.0
  %v524 = vmax.f32 %v380, 0.0
  %v525 = vmax.f32 %v381, 0.0
  %v526 = vmax.f32 %v382, 0.0
  %v527 = vmax.f32 %v383, 0.0
  %v528 = vmax.f32 %v384, 0.0
  %v529 = vmax.f32 %v385, 0.0
  %v530 = vmax.f32 %v386, 0.0
  %v531 = vmax.f32 %v387, 0.0
  %v532 = vmax.f32 %v388, 0.0
  %v533 = vmax.f32 %v389, 0.0
  %v534 = vmax.f32 %v390, 0.0
  %v535 = vmax.f32 %v391, 0.0
  %v536 = vmax.f32 %v392, 0.0
  %v537 = vmax.f32 %v393, 0.0
  %v538 = vmax.f32 %v394, 0.0
  %v539 = vmax.f32 %v395, 0.0
  %v540 = vmax.f32 %v396, 0.0
  %v541 = vmax.f32 %v397, 0.0
  %v542 = vmax.f32 %v398, 0.0
  %v543 = vmax.f32 %v399, 0.0
  %v544 = vmax.f32 %v400, 0.0
  %v545 = vmax.f32 %v401, 0.0
  %v546 = vmax.f32 %v402, 0.0
  %v547 = vmax.f32 %v403, 0.0
  %v548 = vmax.f32 %v404, 0.0
  %v549 = vmax.f32 %v405, 0.0
  %v550 = vmax.f32 %v406, 0.0
  %v551 = vmax.f32 %v407, 0.0
  %v552 = vmax.f32 %v408, 0.0
  %v553 = vmax.f32 %v409, 0.0
  %v554 = vmax.f32 %v410, 0.0
  %v555 = vmax.f32 %v411, 0.0
  %v556 = vmax.f32 %v412, 0.0
  %v557 = vmax.f32 %v413, 0.0
  %v558 = vmax.f32 %v414, 0.0
  %v559 = vmax.f32 %v415, 0.0
  %v560 = vmax.f32 %v416, 0.0
  %v561 = vmax.f32 %v417, 0.0
  %v562 = vmax.f32 %v418, 0.0
  %v563 = vmax.f32 %v419, 0.0
  %v564 = vmax.f32 %v420, 0.0
  %v565 = vmax.f32 %v421, 0.0
  %v566 = vmax.f32 %v422, 0.0
  %v567 = vmax.f32 %v423, 0.0
  %v568 = vmax.f32 %v424, 0.0
  %v569 = vmax.f32 %v425, 0.0
  %v570 = vmax.f32 %v426, 0.0
  %v571 = vmax.f32 %v427, 0.0
  %v572 = vmax.f32 %v428, 0.0
  %v573 = vmax.f32 %v429, 0.0
  %v574 = vmax.f32 %v430, 0.0
  %v575 = vmax.f32 %v431, 0.0
  %v576 = vmax.f32 %v432, 0.0
  %v577 = vmax.f32 %v433, 0.0
  %v578 = vmax.f32 %v434, 0.0
  %v579 = vmax.f32 %v435, 0.0
  %v580 = vmax.f32 %v436, 0.0
  %v581 = vmax.f32 %v437, 0.0
  %v582 = vmax.f32 %v438, 0.0
  %v583 = vmax.f32 %v439, 0.0
  %v584 = vmax.f32 %v440, 0.0
  %v585 = vmax.f32 %v441, 0.0
  %v586 = vmax.f32 %v442, 0.0
  %v587 = vmax.f32 %v443, 0.0
  %v588 = vmax.f32 %v444, 0.0
  %v589 = vmax.f32 %v445, 0.0
  %v590 = vmax.f32 %v446, 0.0
  %v591 = vmax.f32 %v447, 0.0
  %v592 = vmax.f32 %v448, 0.0
  %v593 = vmax.f32 %v449, 0.0
  %v594 = vmax.f32 %v450, 0.0
  %v595 = vmax.f32 %v451, 0.0
  %v596 = vmax.f32 %v452, 0.0
  %v597 = vmax.f32 %v453, 0.0
  %v598 = vmax.f32 %v454, 0.0
  %v599 = vmax.f32 %v455, 0.0
  %v600 = vmax.f32 %v456, 0.0
  %v601 = vmax.f32 %v457, 0.0
  %v602 = vmax.f32 %v458, 0.0
  %v603 = vmax.f32 %v459, 0.0
  %v604 = vmax.f32 %v460, 0.0
  %v605 = vmax.f32 %v461, 0.0
  %v606 = vmax.f32 %v462, 0.0
  %v607 = vmax.f32 %v463, 0.0
  %v608 = vmax.f32 %v464, 0.0
  %v609 = vmax.f32 %v465, 0.0
  %v610 = vmax.f32 %v466, %v467
  %v611 = vmax.f32 %v470, %v471
  %v612 = vmax.f32 %v474, %v475
  %v613 = vmax.f32 %v478, %v479
  %v614 = vmax.f32 %v482, %v483
  %v615 = vmax.f32 %v486, %v487
  %v616 = vmax.f32 %v490, %v491
  %v617 = vmax.f32 %v494, %v495
  %v618 = vmax.f32 %v498, %v499
  %v619 = vmax.f32 %v502, %v503
  %v620 = vmax.f32 %v506, %v507
  %v621 = vmax.f32 %v510, %v511
  %v622 = vmax.f32 %v514, %v515
  %v623 = vmax.f32 %v518, %v519
  %v624 = vmax.f32 %v522, %v523
  %v625 = vmax.f32 %v526, %v527
  %v626 = vmax.f32 %v530, %v531
  %v627 = vmax.f32 %v534, %v535
  %v628 = vmax.f32 %v538, %v539
  %v629 = vmax.f32 %v542, %v543
  %v630 = vmax.f32 %v546, %v547
  %v631 = vmax.f32 %v550, %v551
  %v632 = vmax.f32 %v554, %v555
  %v633 = vmax.f32 %v558, %v559
  %v634 = vmax.f32 %v562, %v563
  %v635 = vmax.f32 %v566, %v567
  %v636 = vmax.f32 %v570, %v571
  %v637 = vmax.f32 %v574, %v575
  %v638 = vmax.f32 %v578, %v579
  %v639 = vmax.f32 %v582, %v583
  %v640 = vmax.f32 %v586, %v587
  %v641 = vmax.f32 %v590, %v591
  %v642 = vmax.f32 %v594, %v595
  %v643 = vmax.f32 %v598, %v599
  %v644 = vmax.f32 %v602, %v603
  %v645 = vmax.f32 %v606, %v607
  %v646 = vmax.f32 %v468, %v469
  %v647 = vmax.f32 %v472, %v473
  %v648 = vmax.f32 %v476, %v477
  %v649 = vmax.f32 %v480, %v481
  %v650 = vmax.f32 %v484, %v485
  %v651 = vmax.f32 %v488, %v489
  %v652 = vmax.f32 %v492, %v493
  %v653 = vmax.f32 %v496, %v497
  %v654 = vmax.f32 %v500, %v501
  %v655 = vmax.f32 %v504, %v505
  %v656 = vmax.f32 %v508, %v509
  %v657 = vmax.f32 %v512, %v513
  %v658 = vmax.f32 %v516, %v517
  %v659 = vmax.f32 %v520, %v521
  %v660 = vmax.f32 %v524, %v525
  %v661 = vmax.f32 %v528, %v529
  %v662 = vmax.f32 %v532, %v533
  %v663 = vmax.f32 %v536, %v537
  %v664 = vmax.f32 %v540, %v541
  %v665 = vmax.f32 %v544, %v545
  %v666 = vmax.f32 %v548, %v549
  %v667 = vmax.f32 %v552, %v553
  %v668 = vmax.f32 %v556, %v557
  %v669 = vmax.f32 %v560, %v561
  %v670 = vmax.f32 %v564, %v565
  %v671 = vmax.f32 %v568, %v569
  %v672 = vmax.f32 %v572, %v573
  %v673 = vmax.f32 %v576, %v577
  %v674 = vmax.f32 %v580, %v581
  %v675 = vmax.f32 %v584, %v585
  %v676 = vmax.f32 %v588, %v589
  %v677 = vmax.f32 %v592, %v593
  %v678 = vmax.f32 %v596, %v597
  %v679 = vmax.f32 %v600, %v601
  %v680 = vmax.f32 %v604, %v605
  %v681 = vmax.f32 %v608, %v609
  %v682 = vmax.f32 %v610, %v646
  %v683 = vmax.f32 %v611, %v647
  %v684 = vmax.f32 %v612, %v648
  %v685 = vmax.f32 %v613, %v649
  %v686 = vmax.f32 %v614, %v650
  %v687 = vmax.f32 %v615, %v651
  %v688 = vmax.f32 %v616, %v652
  %v689 = vmax.f32 %v617, %v653
  %v690 = vmax.f32 %v618, %v654
  %v691 = vmax.f32 %v619, %v655
  %v692 = vmax.f32 %v620, %v656
  %v693 = vmax.f32 %v621, %v657
  %v694 = vmax.f32 %v622, %v658
  %v695 = vmax.f32 %v623, %v659
  %v696 = vmax.f32 %v624, %v660
  %v697 = vmax.f32 %v625, %v661
  %v698 = vmax.f32 %v626, %v662
  %v699 = vmax.f32 %v627, %v663
  %v700 = vmax.f32 %v628, %v664
  %v701 = vmax.f32 %v629, %v665
  %v702 = vmax.f32 %v630, %v666
  %v703 = vmax.f32 %v631, %v667
  %v704 = vmax.f32 %v632, %v668
  %v705 = vmax.f32 %v633, %v669
  %v706 = vmax.f32 %v634, %v670
  %v707 = vmax.f32 %v635, %v671
  %v708 = vmax.f32 %v636, %v672
  %v709 = vmax.f32 %v637, %v673
  %v710 = vmax.f32 %v638, %v674
  %v711 = vmax.f32 %v639, %v675
  %v712 = vmax.f32 %v640, %v676
  %v713 = vmax.f32 %v641, %v677
  %v714 = vmax.f32 %v642, %v678
  %v715 = vmax.f32 %v643, %v679
  %v716 = vmax.f32 %v644, %v680
  %v717 = vmax.f32 %v645, %v681
  %718 = vst [vmem:[%s3] sm:$0xff] %v682
  %719 = vst [vmem:[%s3 + $0x8] sm:$0xff] %v683
  %720 = vst [vmem:[%s3 + $0x10] sm:$0xff] %v684
  %721 = vst [vmem:[%s3 + $0x18] sm:$0xff] %v685
  %722 = vst [vmem:[%s3 + $0x20] sm:$0xff] %v686
  %723 = vst [vmem:[%s3 + $0x28] sm:$0xff] %v687
  %724 = vst [vmem:[%s3 + $0x30] sm:$0xff] %v688
  %725 = vst [vmem:[%s3 + $0x38] sm:$0xff] %v689
  %726 = vst [vmem:[%s3 + $0x40] sm:$0xff] %v690
  %727 = vst [vmem:[%s3 + $0x48] sm:$0xff] %v691
  %728 = vst [vmem:[%s3 + $0x50] sm:$0xff] %v692
  %729 = vst [vmem:[%s3 + $0x58] sm:$0xff] %v693
  %730 = vst [vmem:[%s3 + $0x60] sm:$0xff] %v694
  %731 = vst [vmem:[%s3 + $0x68] sm:$0xff] %v695
  %732 = vst [vmem:[%s3 + $0x70] sm:$0xff] %v696
  %733 = vst [vmem:[%s3 + $0x78] sm:$0xff] %v697
  %734 = vst [vmem:[%s3 + $0x80] sm:$0xff] %v698
  %735 = vst [vmem:[%s3 + $0x88] sm:$0xff] %v699
  %736 = vst [vmem:[%s3 + $0x90] sm:$0xff] %v700
  %737 = vst [vmem:[%s3 + $0x98] sm:$0xff] %v701
  %738 = vst [vmem:[%s3 + $0xa0] sm:$0xff] %v702
  %739 = vst [vmem:[%s3 + $0xa8] sm:$0xff] %v703
  %740 = vst [vmem:[%s3 + $0xb0] sm:$0xff] %v704
  %741 = vst [vmem:[%s3 + $0xb8] sm:$0xff] %v705
  %742 = vst [vmem:[%s3 + $0xc0] sm:$0xff] %v706
  %743 = vst [vmem:[%s3 + $0xc8] sm:$0xff] %v707
  %744 = vst [vmem:[%s3 + $0xd0] sm:$0xff] %v708
  %745 = vst [vmem:[%s3 + $0xd8] sm:$0xff] %v709
  %746 = vst [vmem:[%s3 + $0xe0] sm:$0xff] %v710
  %747 = vst [vmem:[%s3 + $0xe8] sm:$0xff] %v711
  %748 = vst [vmem:[%s3 + $0xf0] sm:$0xff] %v712
  %749 = vst [vmem:[%s3 + $0xf8] sm:$0xff] %v713
  %750 = vst [vmem:[%s3 + $0x100] sm:$0xff] %v714
  %751 = vst [vmem:[%s3 + $0x108] sm:$0xff] %v715
  %752 = vst [vmem:[%s3 + $0x110] sm:$0xff] %v716
  %753 = vst [vmem:[%s3 + $0x118] sm:$0xff] %v717
  // Predicated region
  $region14: #{extractor_gray_forward.5} parent=0 // pred_check
    _
  $region15: #{extractor_gray_forward.5} parent=0 // pred_check_branch
    %755 = sbr.rel (0) target = $region17
  $region16: #{extractor_gray_forward.5} parent=0 // pred_region
    _
  $region17: #{extractor_gray_forward.5} parent=0 // pred_fallthru
    _
  // Predicated region
  $region18: #{extractor_gray_forward.5} parent=0 // pred_check
    _
  $region19: #{extractor_gray_forward.5} parent=0 // pred_check_branch
    %757 = sbr.rel (0) target = $region21
  $region20: #{extractor_gray_forward.5} parent=0 // pred_region
    _
  $region21: #{extractor_gray_forward.5} parent=0 // pred_fallthru
    _

// kernel: extractor_gray_forward.6
$region0: #{extractor_gray_forward.6}
  #allocation0 [shape = 'u32[]', space=smem, size = 0x4, offset = 0x4, fixed_abs, tag = 'smem constant byte address 0x4 - core index']
  #allocation1 [shape = 'u32[72,128]{1,0:T(1,128)}', space=vmem, size = 0x9000, scoped, tag = 'internal scratch']
  %s0 = inlined_call_operand.vmem [shape: bf16[128,500], index: 0, kind: input, shape index: {}]
  %s1 = inlined_call_operand.vmem [shape: bf16[500,128], index: 1, kind: input, shape index: {}]
  %s2 = inlined_call_operand.vmem [shape: f32[128,128], index: 2, kind: output, shape index: {0}]
  %s3 = inlined_call_operand.vmem [shape: f32[1,1,128], index: 3, kind: output, shape index: {1}]
  %s4 = inlined_call_operand.vmem [shape: f32[1,1,128], index: 4, kind: output, shape index: {2}]
  %5 = xla_tuple %s2, %s3, %s4
  %s6 = sld [smem:[#allocation0]]
  $region34: #{extractor_gray_forward.6} parent=0
    _
  %s8 = ssub.s32 1, %s6
  %s9 = scalar_select 0, %s8, %s6
  // Predicated region
  $region2: #{extractor_gray_forward.6} parent=0 // pred_check
    _
  $region3: #{extractor_gray_forward.6} parent=0 // pred_check_branch
    %11 = sbr.rel (0) target = $region5
  $region4: #{extractor_gray_forward.6} parent=0 // pred_region
    _
  $region5: #{extractor_gray_forward.6} parent=0 // pred_fallthru
    _
  // Predicated region
  $region6: #{extractor_gray_forward.6} parent=0 // pred_check
    _
  $region7: #{extractor_gray_forward.6} parent=0 // pred_check_branch
    %13 = sbr.rel (0) target = $region9
  $region8: #{extractor_gray_forward.6} parent=0 // pred_region
    _
  $region9: #{extractor_gray_forward.6} parent=0 // pred_fallthru
    _
  %v14 = vld [vmem:[%s0] sm:$0xff]
  %v15 = vld [vmem:[%s0 + $0x8] sm:$0xff]
  %v16 = vld [vmem:[%s0 + $0x10] sm:$0xff]
  %v17 = vld [vmem:[%s0 + $0x18] sm:$0xff]
  %v18 = vld [vmem:[%s0 + $0x20] sm:$0xff]
  %v19 = vld [vmem:[%s0 + $0x28] sm:$0xff]
  %v20 = vld [vmem:[%s0 + $0x30] sm:$0xff]
  %v21 = vld [vmem:[%s0 + $0x38] sm:$0xff]
  %v22 = vld [vmem:[%s0 + $0x40] sm:$0xff]
  %v23 = vld [vmem:[%s0 + $0x48] sm:$0xff]
  %v24 = vld [vmem:[%s0 + $0x50] sm:$0xff]
  %v25 = vld [vmem:[%s0 + $0x58] sm:$0xff]
  %v26 = vld [vmem:[%s0 + $0x60] sm:$0xff]
  %v27 = vld [vmem:[%s0 + $0x68] sm:$0xff]
  %v28 = vld [vmem:[%s0 + $0x70] sm:$0xff]
  %v29 = vld [vmem:[%s0 + $0x78] sm:$0xff]
  %v30 = vld [vmem:[%s0 + $0x80] sm:$0xff]
  %v31 = vld [vmem:[%s0 + $0x88] sm:$0xff]
  %v32 = vld [vmem:[%s0 + $0x90] sm:$0xff]
  %v33 = vld [vmem:[%s0 + $0x98] sm:$0xff]
  %v34 = vld [vmem:[%s0 + $0xa0] sm:$0xff]
  %v35 = vld [vmem:[%s0 + $0xa8] sm:$0xff]
  %v36 = vld [vmem:[%s0 + $0xb0] sm:$0xff]
  %v37 = vld [vmem:[%s0 + $0xb8] sm:$0xff]
  %v38 = vld [vmem:[%s0 + $0xc0] sm:$0xff]
  %v39 = vld [vmem:[%s0 + $0xc8] sm:$0xff]
  %v40 = vld [vmem:[%s0 + $0xd0] sm:$0xff]
  %v41 = vld [vmem:[%s0 + $0xd8] sm:$0xff]
  %v42 = vld [vmem:[%s0 + $0xe0] sm:$0xff]
  %v43 = vld [vmem:[%s0 + $0xe8] sm:$0xff]
  %v44 = vld [vmem:[%s0 + $0xf0] sm:$0xff]
  %v45 = vld [vmem:[%s0 + $0xf8] sm:$0xff]
  %v46 = vld [vmem:[%s1] sm:$0xf]
  %v47 = vld [vmem:[%s1 + $0x4] sm:$0xf]
  %v48 = vld [vmem:[%s1 + $0x8] sm:$0xf]
  %v49 = vld [vmem:[%s1 + $0xc] sm:$0xf]
  %v50 = vld [vmem:[%s1 + $0x10] sm:$0xf]
  %v51 = vld [vmem:[%s1 + $0x14] sm:$0xf]
  %v52 = vld [vmem:[%s1 + $0x18] sm:$0xf]
  %v53 = vld [vmem:[%s1 + $0x1c] sm:$0xf]
  %v54 = vld [vmem:[%s1 + $0x20] sm:$0xf]
  %v55 = vld [vmem:[%s1 + $0x24] sm:$0xf]
  %v56 = vld [vmem:[%s1 + $0x28] sm:$0xf]
  %v57 = vld [vmem:[%s1 + $0x2c] sm:$0xf]
  %v58 = vld [vmem:[%s1 + $0x30] sm:$0xf]
  %v59 = vld [vmem:[%s1 + $0x34] sm:$0xf]
  %v60 = vld [vmem:[%s1 + $0x38] sm:$0xf]
  %v61 = vld [vmem:[%s1 + $0x3c] sm:$0xf]
  %v62 = vld [vmem:[%s1 + $0x40] sm:$0xf]
  %v63 = vld [vmem:[%s1 + $0x44] sm:$0xf]
  %v64 = vld [vmem:[%s1 + $0x48] sm:$0xf]
  %v65 = vld [vmem:[%s1 + $0x4c] sm:$0xf]
  %v66 = vld [vmem:[%s1 + $0x50] sm:$0xf]
  %v67 = vld [vmem:[%s1 + $0x54] sm:$0xf]
  %v68 = vld [vmem:[%s1 + $0x58] sm:$0xf]
  %v69 = vld [vmem:[%s1 + $0x5c] sm:$0xf]
  %v70 = vld [vmem:[%s1 + $0x60] sm:$0xf]
  %v71 = vld [vmem:[%s1 + $0x64] sm:$0xf]
  %v72 = vld [vmem:[%s1 + $0x68] sm:$0xf]
  %v73 = vld [vmem:[%s1 + $0x6c] sm:$0xf]
  %v74 = vld [vmem:[%s1 + $0x70] sm:$0xf]
  %v75 = vld [vmem:[%s1 + $0x74] sm:$0xf]
  %v76 = vld [vmem:[%s1 + $0x78] sm:$0xf]
  %v77 = vld [vmem:[%s1 + $0x7c] sm:$0xf]
  %v78 = vld [vmem:[%s1 + $0x80] sm:$0xf]
  %v79 = vld [vmem:[%s1 + $0x84] sm:$0xf]
  %v80 = vld [vmem:[%s1 + $0x88] sm:$0xf]
  %v81 = vld [vmem:[%s1 + $0x8c] sm:$0xf]
  %v82 = vld [vmem:[%s1 + $0x90] sm:$0xf]
  %v83 = vld [vmem:[%s1 + $0x94] sm:$0xf]
  %v84 = vld [vmem:[%s1 + $0x98] sm:$0xf]
  %v85 = vld [vmem:[%s1 + $0x9c] sm:$0xf]
  %v86 = vld [vmem:[%s1 + $0xa0] sm:$0xf]
  %v87 = vld [vmem:[%s1 + $0xa4] sm:$0xf]
  %v88 = vld [vmem:[%s1 + $0xa8] sm:$0xf]
  %v89 = vld [vmem:[%s1 + $0xac] sm:$0xf]
  %v90 = vld [vmem:[%s1 + $0xb0] sm:$0xf]
  %v91 = vld [vmem:[%s1 + $0xb4] sm:$0xf]
  %v92 = vld [vmem:[%s1 + $0xb8] sm:$0xf]
  %v93 = vld [vmem:[%s1 + $0xbc] sm:$0xf]
  %v94 = vld [vmem:[%s1 + $0xc0] sm:$0xf]
  %v95 = vld [vmem:[%s1 + $0xc4] sm:$0xf]
  %v96 = vld [vmem:[%s1 + $0xc8] sm:$0xf]
  %v97 = vld [vmem:[%s1 + $0xcc] sm:$0xf]
  %v98 = vld [vmem:[%s1 + $0xd0] sm:$0xf]
  %v99 = vld [vmem:[%s1 + $0xd4] sm:$0xf]
  %v100 = vld [vmem:[%s1 + $0xd8] sm:$0xf]
  %v101 = vld [vmem:[%s1 + $0xdc] sm:$0xf]
  %v102 = vld [vmem:[%s1 + $0xe0] sm:$0xf]
  %v103 = vld [vmem:[%s1 + $0xe4] sm:$0xf]
  %v104 = vld [vmem:[%s1 + $0xe8] sm:$0xf]
  %v105 = vld [vmem:[%s1 + $0xec] sm:$0xf]
  %v106 = vld [vmem:[%s1 + $0xf0] sm:$0xf]
  %v107 = vld [vmem:[%s1 + $0xf4] sm:$0xf]
  %v108 = vld [vmem:[%s1 + $0xf8] sm:$0x3]
  %v141 = vunpack.c.l.b16 %v14
  %v142 = vunpack.c.h.b16 %v14
  %v143 = vunpack.c.l.b16 %v15
  %v144 = vunpack.c.h.b16 %v15
  %v145 = vunpack.c.l.b16 %v16
  %v146 = vunpack.c.h.b16 %v16
  %v147 = vunpack.c.l.b16 %v17
  %v148 = vunpack.c.h.b16 %v17
  %v149 = vunpack.c.l.b16 %v18
  %v150 = vunpack.c.h.b16 %v18
  %v151 = vunpack.c.l.b16 %v19
  %v152 = vunpack.c.h.b16 %v19
  %v153 = vunpack.c.l.b16 %v20
  %v154 = vunpack.c.h.b16 %v20
  %v155 = vunpack.c.l.b16 %v21
  %v156 = vunpack.c.h.b16 %v21
  %v157 = vunpack.c.l.b16 %v22
  %v158 = vunpack.c.h.b16 %v22
  %v159 = vunpack.c.l.b16 %v23
  %v160 = vunpack.c.h.b16 %v23
  %v161 = vunpack.c.l.b16 %v24
  %v162 = vunpack.c.h.b16 %v24
  %v163 = vunpack.c.l.b16 %v25
  %v164 = vunpack.c.h.b16 %v25
  %v165 = vunpack.c.l.b16 %v26
  %v166 = vunpack.c.h.b16 %v26
  %v167 = vunpack.c.l.b16 %v27
  %v168 = vunpack.c.h.b16 %v27
  %v169 = vunpack.c.l.b16 %v28
  %v170 = vunpack.c.h.b16 %v28
  %v171 = vunpack.c.l.b16 %v29
  %v172 = vunpack.c.h.b16 %v29
  %v173 = vunpack.c.l.b16 %v30
  %v174 = vunpack.c.h.b16 %v30
  %v175 = vunpack.c.l.b16 %v31
  %v176 = vunpack.c.h.b16 %v31
  %v177 = vunpack.c.l.b16 %v32
  %v178 = vunpack.c.h.b16 %v32
  %v179 = vunpack.c.l.b16 %v33
  %v180 = vunpack.c.h.b16 %v33
  %v181 = vunpack.c.l.b16 %v34
  %v182 = vunpack.c.h.b16 %v34
  %v183 = vunpack.c.l.b16 %v35
  %v184 = vunpack.c.h.b16 %v35
  %v185 = vunpack.c.l.b16 %v36
  %v186 = vunpack.c.h.b16 %v36
  %v187 = vunpack.c.l.b16 %v37
  %v188 = vunpack.c.h.b16 %v37
  %v189 = vunpack.c.l.b16 %v38
  %v190 = vunpack.c.h.b16 %v38
  %v191 = vunpack.c.l.b16 %v39
  %v192 = vunpack.c.h.b16 %v39
  %v193 = vunpack.c.l.b16 %v40
  %v194 = vunpack.c.h.b16 %v40
  %v195 = vunpack.c.l.b16 %v41
  %v196 = vunpack.c.h.b16 %v41
  %v197 = vunpack.c.l.b16 %v42
  %v198 = vunpack.c.h.b16 %v42
  %v199 = vunpack.c.l.b16 %v43
  %v200 = vunpack.c.h.b16 %v43
  %v201 = vunpack.c.l.b16 %v44
  %v202 = vunpack.c.h.b16 %v44
  %v203 = vunpack.c.l.b16 %v45
  %v204 = vunpack.c.h.b16 %v45
  %v205 = vpack.c.b16 %v145, %v141
  %v206 = vpack.c.b16 %v146, %v142
  %v207 = vpack.c.b16 %v147, %v143
  %v208 = vpack.c.b16 %v148, %v144
  %v209 = vpack.c.b16 %v153, %v149
  %v210 = vpack.c.b16 %v154, %v150
  %v211 = vpack.c.b16 %v155, %v151
  %v212 = vpack.c.b16 %v156, %v152
  %v213 = vpack.c.b16 %v161, %v157
  %v214 = vpack.c.b16 %v162, %v158
  %v215 = vpack.c.b16 %v163, %v159
  %v216 = vpack.c.b16 %v164, %v160
  %v217 = vpack.c.b16 %v169, %v165
  %v218 = vpack.c.b16 %v170, %v166
  %v219 = vpack.c.b16 %v171, %v167
  %v220 = vpack.c.b16 %v172, %v168
  %v221 = vpack.c.b16 %v177, %v173
  %v222 = vpack.c.b16 %v178, %v174
  %v223 = vpack.c.b16 %v179, %v175
  %v224 = vpack.c.b16 %v180, %v176
  %v225 = vpack.c.b16 %v185, %v181
  %v226 = vpack.c.b16 %v186, %v182
  %v227 = vpack.c.b16 %v187, %v183
  %v228 = vpack.c.b16 %v188, %v184
  %v229 = vpack.c.b16 %v193, %v189
  %v230 = vpack.c.b16 %v194, %v190
  %v231 = vpack.c.b16 %v195, %v191
  %v232 = vpack.c.b16 %v196, %v192
  %v233 = vpack.c.b16 %v201, %v197
  %v234 = vpack.c.b16 %v202, %v198
  %v235 = vpack.c.b16 %v203, %v199
  %v236 = vpack.c.b16 %v204, %v200
  %v324 = vunpack.c.l.b16 %v46
  %v325 = vunpack.c.l.b16 %v47
  %v326 = vunpack.c.l.b16 %v48
  %v327 = vunpack.c.l.b16 %v49
  %v328 = vunpack.c.l.b16 %v50
  %v329 = vunpack.c.l.b16 %v51
  %v330 = vunpack.c.l.b16 %v52
  %v331 = vunpack.c.l.b16 %v53
  %v332 = vunpack.c.l.b16 %v54
  %v333 = vunpack.c.l.b16 %v55
  %v334 = vunpack.c.l.b16 %v56
  %v335 = vunpack.c.l.b16 %v57
  %v336 = vunpack.c.l.b16 %v58
  %v337 = vunpack.c.l.b16 %v59
  %v338 = vunpack.c.l.b16 %v60
  %v339 = vunpack.c.l.b16 %v61
  %v340 = vunpack.c.l.b16 %v62
  %v341 = vunpack.c.l.b16 %v63
  %v342 = vunpack.c.l.b16 %v64
  %v343 = vunpack.c.l.b16 %v65
  %v344 = vunpack.c.l.b16 %v66
  %v345 = vunpack.c.l.b16 %v67
  %v346 = vunpack.c.l.b16 %v68
  %v347 = vunpack.c.l.b16 %v69
  %v348 = vunpack.c.l.b16 %v70
  %v349 = vunpack.c.l.b16 %v71
  %v350 = vunpack.c.l.b16 %v72
  %v351 = vunpack.c.l.b16 %v73
  %v352 = vunpack.c.l.b16 %v74
  %v353 = vunpack.c.l.b16 %v75
  %v354 = vunpack.c.l.b16 %v76
  %v355 = vunpack.c.l.b16 %v77
  %v356 = vunpack.c.l.b16 %v78
  %v357 = vunpack.c.l.b16 %v79
  %v358 = vunpack.c.l.b16 %v80
  %v359 = vunpack.c.l.b16 %v81
  %v360 = vunpack.c.l.b16 %v82
  %v361 = vunpack.c.l.b16 %v83
  %v362 = vunpack.c.l.b16 %v84
  %v363 = vunpack.c.l.b16 %v85
  %v364 = vunpack.c.l.b16 %v86
  %v365 = vunpack.c.l.b16 %v87
  %v366 = vunpack.c.l.b16 %v88
  %v367 = vunpack.c.l.b16 %v89
  %v368 = vunpack.c.l.b16 %v90
  %v369 = vunpack.c.l.b16 %v91
  %v370 = vunpack.c.l.b16 %v92
  %v371 = vunpack.c.l.b16 %v93
  %v372 = vunpack.c.l.b16 %v94
  %v373 = vunpack.c.l.b16 %v95
  %v374 = vunpack.c.l.b16 %v96
  %v375 = vunpack.c.l.b16 %v97
  %v376 = vunpack.c.l.b16 %v98
  %v377 = vunpack.c.l.b16 %v99
  %v378 = vunpack.c.l.b16 %v100
  %v379 = vunpack.c.l.b16 %v101
  %v380 = vunpack.c.l.b16 %v102
  %v381 = vunpack.c.l.b16 %v103
  %v382 = vunpack.c.l.b16 %v104
  %v383 = vunpack.c.l.b16 %v105
  %v384 = vunpack.c.l.b16 %v106
  %v385 = vunpack.c.l.b16 %v107
  %v386 = vunpack.c.l.b16 %v108
  %v387 = vpack.c.b16 %v325, %v324
  %v388 = vpack.c.b16 %v327, %v326
  %v389 = vpack.c.b16 %v329, %v328
  %v390 = vpack.c.b16 %v331, %v330
  %v391 = vpack.c.b16 %v333, %v332
  %v392 = vpack.c.b16 %v335, %v334
  %v393 = vpack.c.b16 %v337, %v336
  %v394 = vpack.c.b16 %v339, %v338
  %v395 = vpack.c.b16 %v341, %v340
  %v396 = vpack.c.b16 %v343, %v342
  %v397 = vpack.c.b16 %v345, %v344
  %v398 = vpack.c.b16 %v347, %v346
  %v399 = vpack.c.b16 %v349, %v348
  %v400 = vpack.c.b16 %v351, %v350
  %v401 = vpack.c.b16 %v353, %v352
  %v402 = vpack.c.b16 %v355, %v354
  %v403 = vpack.c.b16 %v357, %v356
  %v404 = vpack.c.b16 %v359, %v358
  %v405 = vpack.c.b16 %v361, %v360
  %v406 = vpack.c.b16 %v363, %v362
  %v407 = vpack.c.b16 %v365, %v364
  %v408 = vpack.c.b16 %v367, %v366
  %v409 = vpack.c.b16 %v369, %v368
  %v410 = vpack.c.b16 %v371, %v370
  %v411 = vpack.c.b16 %v373, %v372
  %v412 = vpack.c.b16 %v375, %v374
  %v413 = vpack.c.b16 %v377, %v376
  %v414 = vpack.c.b16 %v379, %v378
  %v415 = vpack.c.b16 %v381, %v380
  %v416 = vpack.c.b16 %v383, %v382
  %v417 = vpack.c.b16 %v385, %v384
  %v418 = vpack.c.b16 %v386, %v386
  %vm450 = vcmask 949248
  %v452 = vsel %vm450, %v208, 0
  %v455 = vsel %vm450, %v212, 0
  %v458 = vsel %vm450, %v216, 0
  %v461 = vsel %vm450, %v220, 0
  %v464 = vsel %vm450, %v224, 0
  %v467 = vsel %vm450, %v228, 0
  %v470 = vsel %vm450, %v232, 0
  %v473 = vsel %vm450, %v236, 0
  %vm475 = vcmask 1041408
  %v477 = vsel %vm475, %v418, 0
  %479 = vmatpush.bf16.msra.mxu0 %v394
  %480 = vmatpush.bf16.msra.mxu0 %v393
  %481 = vmatpush.bf16.msra.mxu0 %v392
  %482 = vmatpush.bf16.msra.mxu0 %v391
  %483 = vmatpush.bf16.msra.mxu0 %v390
  %484 = vmatpush.bf16.msra.mxu0 %v389
  %485 = vmatpush.bf16.msra.mxu0 %v388
  %486 = vmatpush.bf16.msra.mxu0 %v387
  %487 = vmatmul.bf16.gmra.mxu0 %v205
  %v488 = vpop.f32.mrf.mxu0
  %v489 = vadd.f32 0.0, %v488
  %v490 = vpop.f32.mrf.mxu0
  %v491 = vadd.f32 0.0, %v490
  %492 = vmatmul.bf16.gmra.mxu0 %v209
  %v493 = vpop.f32.mrf.mxu0
  %v494 = vadd.f32 0.0, %v493
  %v495 = vpop.f32.mrf.mxu0
  %v496 = vadd.f32 0.0, %v495
  %497 = vmatmul.bf16.gmra.mxu0 %v213
  %v498 = vpop.f32.mrf.mxu0
  %v499 = vadd.f32 0.0, %v498
  %v500 = vpop.f32.mrf.mxu0
  %v501 = vadd.f32 0.0, %v500
  %502 = vmatmul.bf16.gmra.mxu0 %v217
  %v503 = vpop.f32.mrf.mxu0
  %v504 = vadd.f32 0.0, %v503
  %v505 = vpop.f32.mrf.mxu0
  %v506 = vadd.f32 0.0, %v505
  %507 = vmatmul.bf16.gmra.mxu0 %v221
  %v508 = vpop.f32.mrf.mxu0
  %v509 = vadd.f32 0.0, %v508
  %v510 = vpop.f32.mrf.mxu0
  %v511 = vadd.f32 0.0, %v510
  %512 = vmatmul.bf16.gmra.mxu0 %v225
  %v513 = vpop.f32.mrf.mxu0
  %v514 = vadd.f32 0.0, %v513
  %v515 = vpop.f32.mrf.mxu0
  %v516 = vadd.f32 0.0, %v515
  %517 = vmatmul.bf16.gmra.mxu0 %v229
  %v518 = vpop.f32.mrf.mxu0
  %v519 = vadd.f32 0.0, %v518
  %v520 = vpop.f32.mrf.mxu0
  %v521 = vadd.f32 0.0, %v520
  %522 = vmatmul.bf16.gmra.mxu0 %v233
  %v523 = vpop.f32.mrf.mxu0
  %v524 = vadd.f32 0.0, %v523
  %v525 = vpop.f32.mrf.mxu0
  %v526 = vadd.f32 0.0, %v525
  %527 = vdwg.mxu0
  %528 = vmatpush.bf16.msra.mxu0 %v402
  %529 = vmatpush.bf16.msra.mxu0 %v401
  %530 = vmatpush.bf16.msra.mxu0 %v400
  %531 = vmatpush.bf16.msra.mxu0 %v399
  %532 = vmatpush.bf16.msra.mxu0 %v398
  %533 = vmatpush.bf16.msra.mxu0 %v397
  %534 = vmatpush.bf16.msra.mxu0 %v396
  %535 = vmatpush.bf16.msra.mxu0 %v395
  %536 = vmatmul.bf16.gmra.mxu0 %v206
  %v537 = vpop.f32.mrf.mxu0
  %v538 = vadd.f32 %v489, %v537
  %v539 = vpop.f32.mrf.mxu0
  %v540 = vadd.f32 %v491, %v539
  %541 = vmatmul.bf16.gmra.mxu0 %v210
  %v542 = vpop.f32.mrf.mxu0
  %v543 = vadd.f32 %v494, %v542
  %v544 = vpop.f32.mrf.mxu0
  %v545 = vadd.f32 %v496, %v544
  %546 = vmatmul.bf16.gmra.mxu0 %v214
  %v547 = vpop.f32.mrf.mxu0
  %v548 = vadd.f32 %v499, %v547
  %v549 = vpop.f32.mrf.mxu0
  %v550 = vadd.f32 %v501, %v549
  %551 = vmatmul.bf16.gmra.mxu0 %v218
  %v552 = vpop.f32.mrf.mxu0
  %v553 = vadd.f32 %v504, %v552
  %v554 = vpop.f32.mrf.mxu0
  %v555 = vadd.f32 %v506, %v554
  %556 = vmatmul.bf16.gmra.mxu0 %v222
  %v557 = vpop.f32.mrf.mxu0
  %v558 = vadd.f32 %v509, %v557
  %v559 = vpop.f32.mrf.mxu0
  %v560 = vadd.f32 %v511, %v559
  %561 = vmatmul.bf16.gmra.mxu0 %v226
  %v562 = vpop.f32.mrf.mxu0
  %v563 = vadd.f32 %v514, %v562
  %v564 = vpop.f32.mrf.mxu0
  %v565 = vadd.f32 %v516, %v564
  %566 = vmatmul.bf16.gmra.mxu0 %v230
  %v567 = vpop.f32.mrf.mxu0
  %v568 = vadd.f32 %v519, %v567
  %v569 = vpop.f32.mrf.mxu0
  %v570 = vadd.f32 %v521, %v569
  %571 = vmatmul.bf16.gmra.mxu0 %v234
  %v572 = vpop.f32.mrf.mxu0
  %v573 = vadd.f32 %v524, %v572
  %v574 = vpop.f32.mrf.mxu0
  %v575 = vadd.f32 %v526, %v574
  %576 = vdwg.mxu0
  %577 = vmatpush.bf16.msra.mxu0 %v410
  %578 = vmatpush.bf16.msra.mxu0 %v409
  %579 = vmatpush.bf16.msra.mxu0 %v408
  %580 = vmatpush.bf16.msra.mxu0 %v407
  %581 = vmatpush.bf16.msra.mxu0 %v406
  %582 = vmatpush.bf16.msra.mxu0 %v405
  %583 = vmatpush.bf16.msra.mxu0 %v404
  %584 = vmatpush.bf16.msra.mxu0 %v403
  %585 = vmatmul.bf16.gmra.mxu0 %v207
  %v586 = vpop.f32.mrf.mxu0
  %v587 = vadd.f32 %v538, %v586
  %v588 = vpop.f32.mrf.mxu0
  %v589 = vadd.f32 %v540, %v588
  %590 = vmatmul.bf16.gmra.mxu0 %v211
  %v591 = vpop.f32.mrf.mxu0
  %v592 = vadd.f32 %v543, %v591
  %v593 = vpop.f32.mrf.mxu0
  %v594 = vadd.f32 %v545, %v593
  %595 = vmatmul.bf16.gmra.mxu0 %v215
  %v596 = vpop.f32.mrf.mxu0
  %v597 = vadd.f32 %v548, %v596
  %v598 = vpop.f32.mrf.mxu0
  %v599 = vadd.f32 %v550, %v598
  %600 = vmatmul.bf16.gmra.mxu0 %v219
  %v601 = vpop.f32.mrf.mxu0
  %v602 = vadd.f32 %v553, %v601
  %v603 = vpop.f32.mrf.mxu0
  %v604 = vadd.f32 %v555, %v603
  %605 = vmatmul.bf16.gmra.mxu0 %v223
  %v606 = vpop.f32.mrf.mxu0
  %v607 = vadd.f32 %v558, %v606
  %v608 = vpop.f32.mrf.mxu0
  %v609 = vadd.f32 %v560, %v608
  %610 = vmatmul.bf16.gmra.mxu0 %v227
  %v611 = vpop.f32.mrf.mxu0
  %v612 = vadd.f32 %v563, %v611
  %v613 = vpop.f32.mrf.mxu0
  %v614 = vadd.f32 %v565, %v613
  %615 = vmatmul.bf16.gmra.mxu0 %v231
  %v616 = vpop.f32.mrf.mxu0
  %v617 = vadd.f32 %v568, %v616
  %v618 = vpop.f32.mrf.mxu0
  %v619 = vadd.f32 %v570, %v618
  %620 = vmatmul.bf16.gmra.mxu0 %v235
  %v621 = vpop.f32.mrf.mxu0
  %v622 = vadd.f32 %v573, %v621
  %v623 = vpop.f32.mrf.mxu0
  %v624 = vadd.f32 %v575, %v623
  %625 = vdwg.mxu0
  %626 = vmatpush.bf16.msra.mxu0 %v477
  %627 = vmatpush.bf16.msra.mxu0 %v417
  %628 = vmatpush.bf16.msra.mxu0 %v416
  %629 = vmatpush.bf16.msra.mxu0 %v415
  %630 = vmatpush.bf16.msra.mxu0 %v414
  %631 = vmatpush.bf16.msra.mxu0 %v413
  %632 = vmatpush.bf16.msra.mxu0 %v412
  %633 = vmatpush.bf16.msra.mxu0 %v411
  %634 = vmatmul.bf16.gmra.mxu0 %v452
  %v635 = vpop.f32.mrf.mxu0
  %v636 = vadd.f32 %v587, %v635
  %v637 = vpop.f32.mrf.mxu0
  %v638 = vadd.f32 %v589, %v637
  %639 = vmatmul.bf16.gmra.mxu0 %v455
  %v640 = vpop.f32.mrf.mxu0
  %v641 = vadd.f32 %v592, %v640
  %v642 = vpop.f32.mrf.mxu0
  %v643 = vadd.f32 %v594, %v642
  %644 = vmatmul.bf16.gmra.mxu0 %v458
  %v645 = vpop.f32.mrf.mxu0
  %v646 = vadd.f32 %v597, %v645
  %v647 = vpop.f32.mrf.mxu0
  %v648 = vadd.f32 %v599, %v647
  %649 = vmatmul.bf16.gmra.mxu0 %v461
  %v650 = vpop.f32.mrf.mxu0
  %v651 = vadd.f32 %v602, %v650
  %v652 = vpop.f32.mrf.mxu0
  %v653 = vadd.f32 %v604, %v652
  %654 = vmatmul.bf16.gmra.mxu0 %v464
  %v655 = vpop.f32.mrf.mxu0
  %v656 = vadd.f32 %v607, %v655
  %v657 = vpop.f32.mrf.mxu0
  %v658 = vadd.f32 %v609, %v657
  %659 = vmatmul.bf16.gmra.mxu0 %v467
  %v660 = vpop.f32.mrf.mxu0
  %v661 = vadd.f32 %v612, %v660
  %v662 = vpop.f32.mrf.mxu0
  %v663 = vadd.f32 %v614, %v662
  %664 = vmatmul.bf16.gmra.mxu0 %v470
  %v665 = vpop.f32.mrf.mxu0
  %v666 = vadd.f32 %v617, %v665
  %v667 = vpop.f32.mrf.mxu0
  %v668 = vadd.f32 %v619, %v667
  %669 = vmatmul.bf16.gmra.mxu0 %v473
  %v670 = vpop.f32.mrf.mxu0
  %v671 = vadd.f32 %v622, %v670
  %v672 = vpop.f32.mrf.mxu0
  %v673 = vadd.f32 %v624, %v672
  %674 = vdwg.mxu0
  %675 = vst [vmem:[%s2] sm:$0xff] %v636
  %676 = vst [vmem:[%s2 + $0x8] sm:$0xff] %v638
  %677 = vst [vmem:[%s2 + $0x10] sm:$0xff] %v641
  %678 = vst [vmem:[%s2 + $0x18] sm:$0xff] %v643
  %679 = vst [vmem:[%s2 + $0x20] sm:$0xff] %v646
  %680 = vst [vmem:[%s2 + $0x28] sm:$0xff] %v648
  %681 = vst [vmem:[%s2 + $0x30] sm:$0xff] %v651
  %682 = vst [vmem:[%s2 + $0x38] sm:$0xff] %v653
  %683 = vst [vmem:[%s2 + $0x40] sm:$0xff] %v656
  %684 = vst [vmem:[%s2 + $0x48] sm:$0xff] %v658
  %685 = vst [vmem:[%s2 + $0x50] sm:$0xff] %v661
  %686 = vst [vmem:[%s2 + $0x58] sm:$0xff] %v663
  %687 = vst [vmem:[%s2 + $0x60] sm:$0xff] %v666
  %688 = vst [vmem:[%s2 + $0x68] sm:$0xff] %v668
  %689 = vst [vmem:[%s2 + $0x70] sm:$0xff] %v671
  %690 = vst [vmem:[%s2 + $0x78] sm:$0xff] %v673
  %v691 = vadd.f32 %v636, %v638
  %v692 = vadd.f32 %v691, %v641
  %v693 = vadd.f32 %v692, %v643
  %v694 = vadd.f32 %v693, %v646
  %v695 = vadd.f32 %v694, %v648
  %v696 = vadd.f32 %v695, %v651
  %v697 = vadd.f32 %v696, %v653
  %v698 = vadd.f32 %v697, %v656
  %v699 = vadd.f32 %v698, %v658
  %v700 = vadd.f32 %v699, %v661
  %v701 = vadd.f32 %v700, %v663
  %v702 = vadd.f32 %v701, %v666
  %v703 = vadd.f32 %v702, %v668
  %v704 = vadd.f32 %v703, %v671
  %v705 = vadd.f32 %v704, %v673
  %v706 = vrot.slane %v705, 4
  %v707 = vadd.f32 %v705, %v706
  %v708 = vrot.slane %v707, 2
  %v709 = vadd.f32 %v707, %v708
  %v710 = vrot.slane %v709, 1
  %v711 = vadd.f32 %v709, %v710
  %712 = vst [vmem:[%s3] sm:$0x1] %v711
  %v713 = vmul.f32 %v636, %v636
  %v714 = vmul.f32 %v638, %v638
  %v715 = vmul.f32 %v641, %v641
  %v716 = vmul.f32 %v643, %v643
  %v717 = vmul.f32 %v646, %v646
  %v718 = vmul.f32 %v648, %v648
  %v719 = vmul.f32 %v651, %v651
  %v720 = vmul.f32 %v653, %v653
  %v721 = vmul.f32 %v656, %v656
  %v722 = vmul.f32 %v658, %v658
  %v723 = vmul.f32 %v661, %v661
  %v724 = vmul.f32 %v663, %v663
  %v725 = vmul.f32 %v666, %v666
  %v726 = vmul.f32 %v668, %v668
  %v727 = vmul.f32 %v671, %v671
  %v728 = vmul.f32 %v673, %v673
  %v729 = vadd.f32 %v713, %v714
  %v730 = vadd.f32 %v729, %v715
  %v731 = vadd.f32 %v730, %v716
  %v732 = vadd.f32 %v731, %v717
  %v733 = vadd.f32 %v732, %v718
  %v734 = vadd.f32 %v733, %v719
  %v735 = vadd.f32 %v734, %v720
  %v736 = vadd.f32 %v735, %v721
  %v737 = vadd.f32 %v736, %v722
  %v738 = vadd.f32 %v737, %v723
  %v739 = vadd.f32 %v738, %v724
  %v740 = vadd.f32 %v739, %v725
  %v741 = vadd.f32 %v740, %v726
  %v742 = vadd.f32 %v741, %v727
  %v743 = vadd.f32 %v742, %v728
  %v744 = vrot.slane %v743, 4
  %v745 = vadd.f32 %v743, %v744
  %v746 = vrot.slane %v745, 2
  %v747 = vadd.f32 %v745, %v746
  %v748 = vrot.slane %v747, 1
  %v749 = vadd.f32 %v747, %v748
  %750 = vst [vmem:[%s4] sm:$0x1] %v749
  // Predicated region
  $region10: #{extractor_gray_forward.6} parent=0 // pred_check
    _
  $region11: #{extractor_gray_forward.6} parent=0 // pred_check_branch
    %752 = sbr.rel (0) target = $region13
  $region12: #{extractor_gray_forward.6} parent=0 // pred_region
    _
  $region13: #{extractor_gray_forward.6} parent=0 // pred_fallthru
    _
  // Predicated region
  $region14: #{extractor_gray_forward.6} parent=0 // pred_check
    _
  $region15: #{extractor_gray_forward.6} parent=0 // pred_check_branch
    %754 = sbr.rel (0) target = $region17
  $region16: #{extractor_gray_forward.6} parent=0 // pred_region
    _
  $region17: #{extractor_gray_forward.6} parent=0 // pred_fallthru
    _
  // Predicated region
  $region18: #{extractor_gray_forward.6} parent=0 // pred_check
    _
  $region19: #{extractor_gray_forward.6} parent=0 // pred_check_branch
    %756 = sbr.rel (0) target = $region21
  $region20: #{extractor_gray_forward.6} parent=0 // pred_region
    _
  $region21: #{extractor_gray_forward.6} parent=0 // pred_fallthru
    _
  // Predicated region
  $region22: #{extractor_gray_forward.6} parent=0 // pred_check
    _
  $region23: #{extractor_gray_forward.6} parent=0 // pred_check_branch
    %758 = sbr.rel (0) target = $region25
  $region24: #{extractor_gray_forward.6} parent=0 // pred_region
    _
  $region25: #{extractor_gray_forward.6} parent=0 // pred_fallthru
    _
  // Predicated region
  $region26: #{extractor_gray_forward.6} parent=0 // pred_check
    _
  $region27: #{extractor_gray_forward.6} parent=0 // pred_check_branch
    %760 = sbr.rel (0) target = $region29
  $region28: #{extractor_gray_forward.6} parent=0 // pred_region
    _
  $region29: #{extractor_gray_forward.6} parent=0 // pred_fallthru
    _
  // Predicated region
  $region30: #{extractor_gray_forward.6} parent=0 // pred_check
    _
  $region31: #{extractor_gray_forward.6} parent=0 // pred_check_branch
    %762 = sbr.rel (0) target = $region33
  $region32: #{extractor_gray_forward.6} parent=0 // pred_region
    _
  $region33: #{extractor_gray_forward.6} parent=0 // pred_fallthru
    _

// kernel: extractor_gray_forward.7
$region0: #{extractor_gray_forward.7}
  #allocation0 [shape = 'u32[]', space=smem, size = 0x4, offset = 0x4, fixed_abs, tag = 'smem constant byte address 0x4 - core index']
  #allocation1 [shape = 'u32[72,128]{1,0:T(1,128)}', space=vmem, size = 0x9000, scoped, tag = 'internal scratch']
  %s0 = inlined_call_operand.vmem [shape: f32[32,512], index: 0, kind: input, shape index: {}]
  %s1 = inlined_call_operand.vmem [shape: f32[1,512], index: 1, kind: input, shape index: {}]
  %s2 = inlined_call_operand.vmem [shape: f32[1,512], index: 2, kind: input, shape index: {}]
  %s3 = inlined_call_operand.vmem [shape: f32[32,128], index: 3, kind: output, shape index: {}]
  %s4 = sld [smem:[#allocation0]]
  $region22: #{extractor_gray_forward.7} parent=0
    _
  %s6 = ssub.s32 1, %s4
  %s7 = scalar_select 0, %s6, %s4
  // Predicated region
  $region2: #{extractor_gray_forward.7} parent=0 // pred_check
    _
  $region3: #{extractor_gray_forward.7} parent=0 // pred_check_branch
    %9 = sbr.rel (0) target = $region5
  $region4: #{extractor_gray_forward.7} parent=0 // pred_region
    _
  $region5: #{extractor_gray_forward.7} parent=0 // pred_fallthru
    _
  // Predicated region
  $region6: #{extractor_gray_forward.7} parent=0 // pred_check
    _
  $region7: #{extractor_gray_forward.7} parent=0 // pred_check_branch
    %11 = sbr.rel (0) target = $region9
  $region8: #{extractor_gray_forward.7} parent=0 // pred_region
    _
  $region9: #{extractor_gray_forward.7} parent=0 // pred_fallthru
    _
  // Predicated region
  $region10: #{extractor_gray_forward.7} parent=0 // pred_check
    _
  $region11: #{extractor_gray_forward.7} parent=0 // pred_check_branch
    %13 = sbr.rel (0) target = $region13
  $region12: #{extractor_gray_forward.7} parent=0 // pred_region
    _
  $region13: #{extractor_gray_forward.7} parent=0 // pred_fallthru
    _
  %v14 = vld [vmem:[%s0] sm:$0xff]
  %v15 = vld [vmem:[%s0 + $0x8] sm:$0xff]
  %v16 = vld [vmem:[%s0 + $0x10] sm:$0xff]
  %v17 = vld [vmem:[%s0 + $0x18] sm:$0xff]
  %v18 = vld [vmem:[%s0 + $0x20] sm:$0xff]
  %v19 = vld [vmem:[%s0 + $0x28] sm:$0xff]
  %v20 = vld [vmem:[%s0 + $0x30] sm:$0xff]
  %v21 = vld [vmem:[%s0 + $0x38] sm:$0xff]
  %v22 = vld [vmem:[%s0 + $0x40] sm:$0xff]
  %v23 = vld [vmem:[%s0 + $0x48] sm:$0xff]
  %v24 = vld [vmem:[%s0 + $0x50] sm:$0xff]
  %v25 = vld [vmem:[%s0 + $0x58] sm:$0xff]
  %v26 = vld [vmem:[%s0 + $0x60] sm:$0xff]
  %v27 = vld [vmem:[%s0 + $0x68] sm:$0xff]
  %v28 = vld [vmem:[%s0 + $0x70] sm:$0xff]
  %v29 = vld [vmem:[%s0 + $0x78] sm:$0xff]
  %v30 = vld [vmem:[%s1] sm:$0xf]
  %v32 = vperm.slane %v30, 0
  %v33 = vperm.slane %v30, 1
  %v34 = vperm.slane %v30, 2
  %v35 = vperm.slane %v30, 3
  %v40 = vmul.f32 %v14, %v32
  %v41 = vmul.f32 %v15, %v33
  %v42 = vmul.f32 %v16, %v34
  %v43 = vmul.f32 %v17, %v35
  %v44 = vmul.f32 %v18, %v32
  %v45 = vmul.f32 %v19, %v33
  %v46 = vmul.f32 %v20, %v34
  %v47 = vmul.f32 %v21, %v35
  %v48 = vmul.f32 %v22, %v32
  %v49 = vmul.f32 %v23, %v33
  %v50 = vmul.f32 %v24, %v34
  %v51 = vmul.f32 %v25, %v35
  %v52 = vmul.f32 %v26, %v32
  %v53 = vmul.f32 %v27, %v33
  %v54 = vmul.f32 %v28, %v34
  %v55 = vmul.f32 %v29, %v35
  %v56 = vld [vmem:[%s2] sm:$0xf]
  %v58 = vperm.slane %v56, 0
  %v59 = vperm.slane %v56, 1
  %v60 = vperm.slane %v56, 2
  %v61 = vperm.slane %v56, 3
  %v66 = vadd.f32 %v40, %v58
  %v67 = vadd.f32 %v41, %v59
  %v68 = vadd.f32 %v42, %v60
  %v69 = vadd.f32 %v43, %v61
  %v70 = vadd.f32 %v44, %v58
  %v71 = vadd.f32 %v45, %v59
  %v72 = vadd.f32 %v46, %v60
  %v73 = vadd.f32 %v47, %v61
  %v74 = vadd.f32 %v48, %v58
  %v75 = vadd.f32 %v49, %v59
  %v76 = vadd.f32 %v50, %v60
  %v77 = vadd.f32 %v51, %v61
  %v78 = vadd.f32 %v52, %v58
  %v79 = vadd.f32 %v53, %v59
  %v80 = vadd.f32 %v54, %v60
  %v81 = vadd.f32 %v55, %v61
  %v82 = vmax.f32 %v66, 0.0
  %v83 = vmax.f32 %v67, 0.0
  %v84 = vmax.f32 %v68, 0.0
  %v85 = vmax.f32 %v69, 0.0
  %v86 = vmax.f32 %v70, 0.0
  %v87 = vmax.f32 %v71, 0.0
  %v88 = vmax.f32 %v72, 0.0
  %v89 = vmax.f32 %v73, 0.0
  %v90 = vmax.f32 %v74, 0.0
  %v91 = vmax.f32 %v75, 0.0
  %v92 = vmax.f32 %v76, 0.0
  %v93 = vmax.f32 %v77, 0.0
  %v94 = vmax.f32 %v78, 0.0
  %v95 = vmax.f32 %v79, 0.0
  %v96 = vmax.f32 %v80, 0.0
  %v97 = vmax.f32 %v81, 0.0
  %v98 = vmax.f32 %v82, %v83
  %v99 = vmax.f32 %v86, %v87
  %v100 = vmax.f32 %v90, %v91
  %v101 = vmax.f32 %v94, %v95
  %v102 = vmax.f32 %v84, %v85
  %v103 = vmax.f32 %v88, %v89
  %v104 = vmax.f32 %v92, %v93
  %v105 = vmax.f32 %v96, %v97
  %v106 = vmax.f32 %v98, %v102
  %v107 = vmax.f32 %v99, %v103
  %v108 = vmax.f32 %v100, %v104
  %v109 = vmax.f32 %v101, %v105
  %110 = vst [vmem:[%s3] sm:$0xff] %v106
  %111 = vst [vmem:[%s3 + $0x8] sm:$0xff] %v107
  %112 = vst [vmem:[%s3 + $0x10] sm:$0xff] %v108
  %113 = vst [vmem:[%s3 + $0x18] sm:$0xff] %v109
  // Predicated region
  $region14: #{extractor_gray_forward.7} parent=0 // pred_check
    _
  $region15: #{extractor_gray_forward.7} parent=0 // pred_check_branch
    %115 = sbr.rel (0) target = $region17
  $region16: #{extractor_gray_forward.7} parent=0 // pred_region
    _
  $region17: #{extractor_gray_forward.7} parent=0 // pred_fallthru
    _
  // Predicated region
  $region18: #{extractor_gray_forward.7} parent=0 // pred_check
    _
  $region19: #{extractor_gray_forward.7} parent=0 // pred_check_branch
    %117 = sbr.rel (0) target = $region21
  $region20: #{extractor_gray_forward.7} parent=0 // pred_region
    _
  $region21: #{extractor_gray_forward.7} parent=0 // pred_fallthru
    _

</llo_original>
